<compile_context>
chip_gen: v7x
topology: tpu7x:2x2x1
jax: 0.10.0
libtpu: 0.0.40
codegen_flags: <defaults>
</compile_context>

<pallas_src>
import jax
import jax.numpy as jnp
from jax import lax
from jax.experimental import pallas as pl
from jax.experimental.pallas import tpu as pltpu

# Model hyper-parameters (small, consistent with the module's __init__)
SEQ = 8        # L
BATCH = 2      # N
EMBED = 32     # embed_dim
HEADS = 4      # num_heads
HEAD_DIM = EMBED // HEADS
FF = 64        # ff_dim
LN_EPS = 1e-5
SLAB_W = 128   # lane width of the packed parameter slabs (full lane tile)


def _transformer_block_kernel(x_ref,    # (L, N, E) float32
                              w_ref,    # (3E + FF, 128) packed, pre-transposed weights
                              v_ref,    # (8, 128)       packed biases / LN affine
                              o_ref):   # (L, N, E)
    E, H, Dh, FFD = EMBED, HEADS, HEAD_DIM, FF
    L, N, _ = x_ref.shape
    NL = N * L

    # ---- in-kernel (L,N) -> (N,L) row regroup (replaces two wrapper HBM transposes) ----
    x3 = x_ref[...]                                                    # (L, N, E)
    x = jnp.concatenate([x3[:, n, :] for n in range(N)], axis=0)       # (NL, E), rows (n, l)

    # ---- packed, pre-transposed weights (packed once at init, never per call) ----
    wqkv_t = w_ref[0:E, 0:3 * E]              # (E, 3E), q-cols pre-scaled by 1/sqrt(Dh)
    wo_t   = w_ref[E:2 * E, 0:E]              # (E, E)
    w1_t   = w_ref[2 * E:3 * E, 0:FFD]        # (E, FF)
    w2_t   = w_ref[3 * E:3 * E + FFD, 0:E]    # (FF, E)

    bqkv = v_ref[0:1, 0:3 * E]                # q-part pre-scaled
    bo   = v_ref[1:2, 0:E]
    b1   = v_ref[2:3, 0:FFD]
    b2   = v_ref[3:4, 0:E]
    g1   = v_ref[4:5, 0:E]
    be1  = v_ref[5:6, 0:E]
    g2   = v_ref[6:7, 0:E]
    be2  = v_ref[7:8, 0:E]

    # ---- fused QKV projection for all batches at once ----
    qkv = jnp.dot(x, wqkv_t, preferred_element_type=jnp.float32) + bqkv   # (NL, 3E)

    # ---- multi-head attention: all (batch, head) pairs in ONE batched einsum pair ----
    def split_heads(z):   # (NL, E) rows (n,l) -> (H*N, L, Dh), batch index b = h*N + n
        blocks = [z[:, h * Dh:(h + 1) * Dh].reshape(N, L, Dh) for h in range(H)]
        return jnp.stack(blocks, axis=0).reshape(H * N, L, Dh)

    qh = split_heads(qkv[:, 0:E])
    kh = split_heads(qkv[:, E:2 * E])
    vh = split_heads(qkv[:, 2 * E:3 * E])

    s = jnp.einsum('bld,bmd->blm', qh, kh,
                   preferred_element_type=jnp.float32)                    # (HN, L, L)
    s = s - jnp.max(s, axis=-1, keepdims=True)
    p = jnp.exp(s)
    p = p * pl.reciprocal(jnp.sum(p, axis=-1, keepdims=True), approx=True)
    ctx = jnp.einsum('blm,bmd->bld', p, vh,
                     preferred_element_type=jnp.float32)                  # (HN, L, Dh)

    # back to (NL, E) in (n, l) row order: leading split + per-head lane concat
    ctx3 = ctx.reshape(H, NL, Dh)
    attn = jnp.concatenate([ctx3[h] for h in range(H)], axis=-1)          # (NL, E)

    attn_out = jnp.dot(attn, wo_t, preferred_element_type=jnp.float32) + bo

    # ---- residual + LayerNorm1 (dropout = identity) ----
    x1 = x + attn_out
    mu1 = jnp.mean(x1, axis=-1, keepdims=True)
    xc1 = x1 - mu1
    var1 = jnp.mean(xc1 * xc1, axis=-1, keepdims=True)
    x1n = xc1 * (lax.rsqrt(var1 + LN_EPS) * g1) + be1

    # ---- Feed-forward: Linear -> ReLU -> Linear (all batches at once) ----
    h1 = jnp.maximum(jnp.dot(x1n, w1_t, preferred_element_type=jnp.float32) + b1, 0.0)
    ff = jnp.dot(h1, w2_t, preferred_element_type=jnp.float32) + b2

    # ---- residual + LayerNorm2 ----
    x2 = x1n + ff
    mu2 = jnp.mean(x2, axis=-1, keepdims=True)
    xc2 = x2 - mu2
    var2 = jnp.mean(xc2 * xc2, axis=-1, keepdims=True)
    x2n = xc2 * (lax.rsqrt(var2 + LN_EPS) * g2) + be2

    # ---- regroup rows (n,l) -> (l,n) and store as (L, N, E) ----
    o_ref[...] = jnp.stack([x2n[n * L:(n + 1) * L, :] for n in range(N)], axis=1)


def pack_params(params):
    """Called ONCE at init (not in the forward path): pre-transpose weights, fold the
    1/sqrt(Dh) attention scale into the q projection, pack into two 128-lane slabs."""
    wqkv, bqkv, wo, bo, w1, b1, w2, b2, g1, be1, g2, be2 = params
    scale = 1.0 / float(HEAD_DIM) ** 0.5
    qkv_scale = jnp.concatenate(
        [jnp.full((EMBED,), scale, jnp.float32), jnp.ones((2 * EMBED,), jnp.float32)])

    wqkv_t = (wqkv * qkv_scale[:, None]).T          # (E, 3E), q columns pre-scaled
    bqkv_s = bqkv.reshape(-1) * qkv_scale           # (3E,)

    def padw(a):                                    # pad lanes to a full 128-lane tile
        return jnp.pad(a, ((0, 0), (0, SLAB_W - a.shape[1])))

    # rows [0:E]=Wqkv^T, [E:2E]=Wo^T, [2E:3E]=W1^T, [3E:3E+FF]=W2^T
    w_slab = jnp.concatenate(
        [padw(wqkv_t), padw(wo.T), padw(w1.T), padw(w2.T)], axis=0)       # (3E+FF, 128)

    def row(vec):
        flat = vec.reshape(-1)
        return jnp.pad(flat, (0, SLAB_W - flat.shape[0]))[None, :]

    v_slab = jnp.concatenate(
        [row(bqkv_s), row(bo), row(b1), row(b2),
         row(g1), row(be1), row(g2), row(be2)], axis=0)                   # (8, 128)
    return w_slab, v_slab


@jax.jit
def transformer_block(x, w_slab, v_slab):
    """x: (L, N, E) float32 (same layout as PyTorch nn.MultiheadAttention default).
    w_slab / v_slab: pre-packed parameter slabs from pack_params()."""
    L, N, E = x.shape
    return pl.pallas_call(
        _transformer_block_kernel,
        out_shape=jax.ShapeDtypeStruct((L, N, E), jnp.float32),
        in_specs=[pl.BlockSpec(memory_space=pltpu.MemorySpace.VMEM)] * 3,
        out_specs=pl.BlockSpec(memory_space=pltpu.MemorySpace.VMEM),
        cost_estimate=pl.CostEstimate(
            flops=278_528, transcendentals=608, bytes_accessed=90_112),
        # gridless: whole problem resident in VMEM (<0.1 MiB) in a single invocation
    )(x, w_slab, v_slab)


def init_params(key):
    """Deterministic synthetic parameters matching PyTorch module shapes."""
    ks = jax.random.split(key, 8)
    s = 0.05
    wqkv = jax.random.normal(ks[0], (3 * EMBED, EMBED), jnp.float32) * s
    bqkv = jax.random.normal(ks[1], (3 * EMBED,), jnp.float32) * s
    wo = jax.random.normal(ks[2], (EMBED, EMBED), jnp.float32) * s
    bo = jax.random.normal(ks[3], (EMBED,), jnp.float32) * s
    w1 = jax.random.normal(ks[4], (FF, EMBED), jnp.float32) * s
    b1 = jax.random.normal(ks[5], (FF,), jnp.float32) * s
    w2 = jax.random.normal(ks[6], (EMBED, FF), jnp.float32) * s
    b2 = jax.random.normal(ks[7], (EMBED,), jnp.float32) * s
    g1 = jnp.ones((EMBED,), jnp.float32)
    be1 = jnp.zeros((EMBED,), jnp.float32)
    g2 = jnp.ones((EMBED,), jnp.float32)
    be2 = jnp.zeros((EMBED,), jnp.float32)
    return (wqkv, bqkv, wo, bo, w1, b1, w2, b2, g1, be1, g2, be2)


def reference_forward(x, params):
    """Pure-JAX reference mirroring the PyTorch forward (dropout = identity)."""
    wqkv, bqkv, wo, bo, w1, b1, w2, b2, g1, be1, g2, be2 = params
    L, N, E = x.shape
    Dh = HEAD_DIM
    scale = 1.0 / (Dh ** 0.5)

    def per_batch(xb):  # (L, E)
        qkv = xb @ wqkv.T + bqkv
        q, k, v = qkv[:, :E], qkv[:, E:2 * E], qkv[:, 2 * E:]
        outs = []
        for h in range(HEADS):
            qh = q[:, h * Dh:(h + 1) * Dh] * scale
            kh = k[:, h * Dh:(h + 1) * Dh]
            vh = v[:, h * Dh:(h + 1) * Dh]
            p = jax.nn.softmax(qh @ kh.T, axis=-1)
            outs.append(p @ vh)
        attn = jnp.concatenate(outs, axis=-1) @ wo.T + bo

        def ln(z, g, b):
            mu = jnp.mean(z, -1, keepdims=True)
            var = jnp.mean((z - mu) ** 2, -1, keepdims=True)
            return (z - mu) * lax.rsqrt(var + LN_EPS) * g + b

        x1 = ln(xb + attn, g1, be1)
        ff = jnp.maximum(x1 @ w1.T + b1, 0.0) @ w2.T + b2
        return ln(x1 + ff, g2, be2)

    return jax.vmap(per_batch, in_axes=1, out_axes=1)(x)


if __name__ == "__main__":
    key = jax.random.PRNGKey(0)
    kx, kp = jax.random.split(key)
    x = jax.random.normal(kx, (SEQ, BATCH, EMBED), jnp.float32)   # (L, N, E)
    params = init_params(kp)

    # Pack parameter slabs ONCE (outside the forward path).
    w_slab, v_slab = pack_params(params)
    w_slab, v_slab = jax.block_until_ready((w_slab, v_slab))

    out = transformer_block(x, w_slab, v_slab)
    out = jax.block_until_ready(out)

    ref = reference_forward(x, params)
    assert out.shape == (SEQ, BATCH, EMBED)
    # Tolerance loosened vs. exact-divide because the kernel uses the EUP approximate
    # reciprocal for the softmax denominator.
    err = float(jnp.max(jnp.abs(out - ref)))
    assert jnp.allclose(out, ref, atol=5e-3, rtol=5e-3), f"mismatch vs reference (max abs err {err})"
    print("KERNEL_OK")
</pallas_src>

<mosaic_0001>
module attributes {stable_mosaic.version = 11 : i64} {
  func.func @_transformer_block_kernel(%arg0: memref<8x2x32xf32, #tpu.memory_space<vmem>>, %arg1: memref<160x128xf32, #tpu.memory_space<vmem>>, %arg2: memref<8x128xf32, #tpu.memory_space<vmem>>, %arg3: memref<8x2x32xf32, #tpu.memory_space<vmem>>) attributes {dimension_semantics = [], scalar_prefetch = 0 : i64, scratch_operands = 0 : i64, tpu.core_type = #tpu.core_type<tc>} {
    %c0 = arith.constant 0 : index
    %c0_0 = arith.constant 0 : index
    %c0_1 = arith.constant 0 : index
    %0 = vector.load %arg0[%c0, %c0_0, %c0_1] : memref<8x2x32xf32, #tpu.memory_space<vmem>>, vector<8x2x32xf32>
    %1 = vector.extract_strided_slice %0 {offsets = [0, 0, 0], sizes = [8, 1, 32], strides = [1, 1, 1]} : vector<8x2x32xf32> to vector<8x1x32xf32>
    %2 = vector.shape_cast %1 : vector<8x1x32xf32> to vector<8x32xf32>
    %3 = vector.extract_strided_slice %0 {offsets = [0, 1, 0], sizes = [8, 1, 32], strides = [1, 1, 1]} : vector<8x2x32xf32> to vector<8x1x32xf32>
    %4 = vector.shape_cast %3 : vector<8x1x32xf32> to vector<8x32xf32>
    %5 = tpu.concatenate %2, %4 in 0 : vector<8x32xf32>, vector<8x32xf32> -> vector<16x32xf32>
    %c0_2 = arith.constant 0 : index
    %c0_3 = arith.constant 0 : index
    %6 = vector.load %arg1[%c0_2, %c0_3] : memref<160x128xf32, #tpu.memory_space<vmem>>, vector<32x96xf32>
    %c32 = arith.constant 32 : index
    %c0_4 = arith.constant 0 : index
    %7 = vector.load %arg1[%c32, %c0_4] : memref<160x128xf32, #tpu.memory_space<vmem>>, vector<32x32xf32>
    %c64 = arith.constant 64 : index
    %c0_5 = arith.constant 0 : index
    %8 = vector.load %arg1[%c64, %c0_5] : memref<160x128xf32, #tpu.memory_space<vmem>>, vector<32x64xf32>
    %c96 = arith.constant 96 : index
    %c0_6 = arith.constant 0 : index
    %9 = vector.load %arg1[%c96, %c0_6] : memref<160x128xf32, #tpu.memory_space<vmem>>, vector<64x32xf32>
    %c0_7 = arith.constant 0 : index
    %c0_8 = arith.constant 0 : index
    %10 = vector.load %arg2[%c0_7, %c0_8] : memref<8x128xf32, #tpu.memory_space<vmem>>, vector<1x96xf32>
    %c1 = arith.constant 1 : index
    %c0_9 = arith.constant 0 : index
    %11 = vector.load %arg2[%c1, %c0_9] : memref<8x128xf32, #tpu.memory_space<vmem>>, vector<1x32xf32>
    %c2 = arith.constant 2 : index
    %c0_10 = arith.constant 0 : index
    %12 = vector.load %arg2[%c2, %c0_10] : memref<8x128xf32, #tpu.memory_space<vmem>>, vector<1x64xf32>
    %c3 = arith.constant 3 : index
    %c0_11 = arith.constant 0 : index
    %13 = vector.load %arg2[%c3, %c0_11] : memref<8x128xf32, #tpu.memory_space<vmem>>, vector<1x32xf32>
    %c4 = arith.constant 4 : index
    %c0_12 = arith.constant 0 : index
    %14 = vector.load %arg2[%c4, %c0_12] : memref<8x128xf32, #tpu.memory_space<vmem>>, vector<1x32xf32>
    %c5 = arith.constant 5 : index
    %c0_13 = arith.constant 0 : index
    %15 = vector.load %arg2[%c5, %c0_13] : memref<8x128xf32, #tpu.memory_space<vmem>>, vector<1x32xf32>
    %c6 = arith.constant 6 : index
    %c0_14 = arith.constant 0 : index
    %16 = vector.load %arg2[%c6, %c0_14] : memref<8x128xf32, #tpu.memory_space<vmem>>, vector<1x32xf32>
    %c7 = arith.constant 7 : index
    %c0_15 = arith.constant 0 : index
    %17 = vector.load %arg2[%c7, %c0_15] : memref<8x128xf32, #tpu.memory_space<vmem>>, vector<1x32xf32>
    %cst = arith.constant dense<0.000000e+00> : vector<16x96xf32>
    %18 = tpu.matmul %5, %6, %cst {dimension_numbers = #tpu.dot_dimension_numbers<[1], [0], [0], [1], [0, 0, 1, 1], [], []>} : vector<16x32xf32>, vector<32x96xf32>, vector<16x96xf32> -> vector<16x96xf32>
    %19 = vector.broadcast %10 : vector<1x96xf32> to vector<16x96xf32>
    %20 = arith.addf %18, %19 : vector<16x96xf32>
    %21 = vector.extract_strided_slice %20 {offsets = [0, 0], sizes = [16, 32], strides = [1, 1]} : vector<16x96xf32> to vector<16x32xf32>
    %22 = vector.extract_strided_slice %21 {offsets = [0, 0], sizes = [16, 8], strides = [1, 1]} : vector<16x32xf32> to vector<16x8xf32>
    %23 = vector.shape_cast %22 : vector<16x8xf32> to vector<2x8x8xf32>
    %24 = vector.extract_strided_slice %21 {offsets = [0, 8], sizes = [16, 8], strides = [1, 1]} : vector<16x32xf32> to vector<16x8xf32>
    %25 = vector.shape_cast %24 : vector<16x8xf32> to vector<2x8x8xf32>
    %26 = vector.extract_strided_slice %21 {offsets = [0, 16], sizes = [16, 8], strides = [1, 1]} : vector<16x32xf32> to vector<16x8xf32>
    %27 = vector.shape_cast %26 : vector<16x8xf32> to vector<2x8x8xf32>
    %28 = vector.extract_strided_slice %21 {offsets = [0, 24], sizes = [16, 8], strides = [1, 1]} : vector<16x32xf32> to vector<16x8xf32>
    %29 = vector.shape_cast %28 : vector<16x8xf32> to vector<2x8x8xf32>
    %30 = vector.shape_cast %23 : vector<2x8x8xf32> to vector<1x2x8x8xf32>
    %31 = vector.shape_cast %25 : vector<2x8x8xf32> to vector<1x2x8x8xf32>
    %32 = vector.shape_cast %27 : vector<2x8x8xf32> to vector<1x2x8x8xf32>
    %33 = vector.shape_cast %29 : vector<2x8x8xf32> to vector<1x2x8x8xf32>
    %34 = tpu.concatenate %30, %31, %32, %33 in 0 : vector<1x2x8x8xf32>, vector<1x2x8x8xf32>, vector<1x2x8x8xf32>, vector<1x2x8x8xf32> -> vector<4x2x8x8xf32>
    %35 = vector.shape_cast %34 : vector<4x2x8x8xf32> to vector<8x8x8xf32>
    %36 = vector.extract_strided_slice %20 {offsets = [0, 32], sizes = [16, 32], strides = [1, 1]} : vector<16x96xf32> to vector<16x32xf32>
    %37 = vector.extract_strided_slice %36 {offsets = [0, 0], sizes = [16, 8], strides = [1, 1]} : vector<16x32xf32> to vector<16x8xf32>
    %38 = vector.shape_cast %37 : vector<16x8xf32> to vector<2x8x8xf32>
    %39 = vector.extract_strided_slice %36 {offsets = [0, 8], sizes = [16, 8], strides = [1, 1]} : vector<16x32xf32> to vector<16x8xf32>
    %40 = vector.shape_cast %39 : vector<16x8xf32> to vector<2x8x8xf32>
    %41 = vector.extract_strided_slice %36 {offsets = [0, 16], sizes = [16, 8], strides = [1, 1]} : vector<16x32xf32> to vector<16x8xf32>
    %42 = vector.shape_cast %41 : vector<16x8xf32> to vector<2x8x8xf32>
    %43 = vector.extract_strided_slice %36 {offsets = [0, 24], sizes = [16, 8], strides = [1, 1]} : vector<16x32xf32> to vector<16x8xf32>
    %44 = vector.shape_cast %43 : vector<16x8xf32> to vector<2x8x8xf32>
    %45 = vector.shape_cast %38 : vector<2x8x8xf32> to vector<1x2x8x8xf32>
    %46 = vector.shape_cast %40 : vector<2x8x8xf32> to vector<1x2x8x8xf32>
    %47 = vector.shape_cast %42 : vector<2x8x8xf32> to vector<1x2x8x8xf32>
    %48 = vector.shape_cast %44 : vector<2x8x8xf32> to vector<1x2x8x8xf32>
    %49 = tpu.concatenate %45, %46, %47, %48 in 0 : vector<1x2x8x8xf32>, vector<1x2x8x8xf32>, vector<1x2x8x8xf32>, vector<1x2x8x8xf32> -> vector<4x2x8x8xf32>
    %50 = vector.shape_cast %49 : vector<4x2x8x8xf32> to vector<8x8x8xf32>
    %51 = vector.extract_strided_slice %20 {offsets = [0, 64], sizes = [16, 32], strides = [1, 1]} : vector<16x96xf32> to vector<16x32xf32>
    %52 = vector.extract_strided_slice %51 {offsets = [0, 0], sizes = [16, 8], strides = [1, 1]} : vector<16x32xf32> to vector<16x8xf32>
    %53 = vector.shape_cast %52 : vector<16x8xf32> to vector<2x8x8xf32>
    %54 = vector.extract_strided_slice %51 {offsets = [0, 8], sizes = [16, 8], strides = [1, 1]} : vector<16x32xf32> to vector<16x8xf32>
    %55 = vector.shape_cast %54 : vector<16x8xf32> to vector<2x8x8xf32>
    %56 = vector.extract_strided_slice %51 {offsets = [0, 16], sizes = [16, 8], strides = [1, 1]} : vector<16x32xf32> to vector<16x8xf32>
    %57 = vector.shape_cast %56 : vector<16x8xf32> to vector<2x8x8xf32>
    %58 = vector.extract_strided_slice %51 {offsets = [0, 24], sizes = [16, 8], strides = [1, 1]} : vector<16x32xf32> to vector<16x8xf32>
    %59 = vector.shape_cast %58 : vector<16x8xf32> to vector<2x8x8xf32>
    %60 = vector.shape_cast %53 : vector<2x8x8xf32> to vector<1x2x8x8xf32>
    %61 = vector.shape_cast %55 : vector<2x8x8xf32> to vector<1x2x8x8xf32>
    %62 = vector.shape_cast %57 : vector<2x8x8xf32> to vector<1x2x8x8xf32>
    %63 = vector.shape_cast %59 : vector<2x8x8xf32> to vector<1x2x8x8xf32>
    %64 = tpu.concatenate %60, %61, %62, %63 in 0 : vector<1x2x8x8xf32>, vector<1x2x8x8xf32>, vector<1x2x8x8xf32>, vector<1x2x8x8xf32> -> vector<4x2x8x8xf32>
    %65 = vector.shape_cast %64 : vector<4x2x8x8xf32> to vector<8x8x8xf32>
    "tpu.trace_start"() <{level = 10 : i32, message = "bld,bmd->blm"}> : () -> ()
    %cst_16 = arith.constant dense<0.000000e+00> : vector<8x8x8xf32>
    %66 = tpu.matmul %35, %50, %cst_16 {dimension_numbers = #tpu.dot_dimension_numbers<[2], [2], [1], [1], [0, 0, 0, 1, 1, 1], [0], [0]>} : vector<8x8x8xf32>, vector<8x8x8xf32>, vector<8x8x8xf32> -> vector<8x8x8xf32>
    "tpu.trace_stop"() : () -> ()
    %cst_17 = arith.constant dense<0xFF800000> : vector<8x8xf32>
    %67 = vector.multi_reduction <maximumf>, %66, %cst_17 [2] : vector<8x8x8xf32> to vector<8x8xf32>
    %68 = vector.shape_cast %67 : vector<8x8xf32> to vector<8x8x1xf32>
    %69 = vector.broadcast %68 : vector<8x8x1xf32> to vector<8x8x8xf32>
    %70 = arith.subf %66, %69 : vector<8x8x8xf32>
    %71 = math.exp %70 : vector<8x8x8xf32>
    %cst_18 = arith.constant dense<0.000000e+00> : vector<8x8xf32>
    %72 = vector.multi_reduction <add>, %71, %cst_18 [2] : vector<8x8x8xf32> to vector<8x8xf32>
    %73 = vector.shape_cast %72 : vector<8x8xf32> to vector<8x8x1xf32>
    %74 = tpu.reciprocal %73 {approx = true} : vector<8x8x1xf32> -> vector<8x8x1xf32>
    %75 = vector.broadcast %74 : vector<8x8x1xf32> to vector<8x8x8xf32>
    %76 = arith.mulf %71, %75 : vector<8x8x8xf32>
    "tpu.trace_start"() <{level = 10 : i32, message = "blm,bmd->bld"}> : () -> ()
    %cst_19 = arith.constant dense<0.000000e+00> : vector<8x8x8xf32>
    %77 = tpu.matmul %76, %65, %cst_19 {dimension_numbers = #tpu.dot_dimension_numbers<[2], [1], [1], [2], [0, 0, 0, 1, 1, 2], [0], [0]>} : vector<8x8x8xf32>, vector<8x8x8xf32>, vector<8x8x8xf32> -> vector<8x8x8xf32>
    "tpu.trace_stop"() : () -> ()
    %78 = vector.shape_cast %77 : vector<8x8x8xf32> to vector<4x16x8xf32>
    %79 = vector.extract_strided_slice %78 {offsets = [0, 0, 0], sizes = [1, 16, 8], strides = [1, 1, 1]} : vector<4x16x8xf32> to vector<1x16x8xf32>
    %80 = vector.shape_cast %79 : vector<1x16x8xf32> to vector<16x8xf32>
    %81 = vector.extract_strided_slice %78 {offsets = [1, 0, 0], sizes = [1, 16, 8], strides = [1, 1, 1]} : vector<4x16x8xf32> to vector<1x16x8xf32>
    %82 = vector.shape_cast %81 : vector<1x16x8xf32> to vector<16x8xf32>
    %83 = vector.extract_strided_slice %78 {offsets = [2, 0, 0], sizes = [1, 16, 8], strides = [1, 1, 1]} : vector<4x16x8xf32> to vector<1x16x8xf32>
    %84 = vector.shape_cast %83 : vector<1x16x8xf32> to vector<16x8xf32>
    %85 = vector.extract_strided_slice %78 {offsets = [3, 0, 0], sizes = [1, 16, 8], strides = [1, 1, 1]} : vector<4x16x8xf32> to vector<1x16x8xf32>
    %86 = vector.shape_cast %85 : vector<1x16x8xf32> to vector<16x8xf32>
    %87 = tpu.concatenate %80, %82, %84, %86 in 1 : vector<16x8xf32>, vector<16x8xf32>, vector<16x8xf32>, vector<16x8xf32> -> vector<16x32xf32>
    %cst_20 = arith.constant dense<0.000000e+00> : vector<16x32xf32>
    %88 = tpu.matmul %87, %7, %cst_20 {dimension_numbers = #tpu.dot_dimension_numbers<[1], [0], [0], [1], [0, 0, 1, 1], [], []>} : vector<16x32xf32>, vector<32x32xf32>, vector<16x32xf32> -> vector<16x32xf32>
    %89 = vector.broadcast %11 : vector<1x32xf32> to vector<16x32xf32>
    %90 = arith.addf %88, %89 : vector<16x32xf32>
    %91 = arith.addf %5, %90 : vector<16x32xf32>
    %cst_21 = arith.constant dense<0.000000e+00> : vector<16xf32>
    %92 = vector.multi_reduction <add>, %91, %cst_21 [1] : vector<16x32xf32> to vector<16xf32>
    %93 = vector.shape_cast %92 : vector<16xf32> to vector<16x1xf32>
    %cst_22 = arith.constant 3.200000e+01 : f32
    %94 = vector.broadcast %cst_22 : f32 to vector<16x1xf32>
    %95 = arith.divf %93, %94 : vector<16x1xf32>
    %96 = vector.broadcast %95 : vector<16x1xf32> to vector<16x32xf32>
    %97 = arith.subf %91, %96 : vector<16x32xf32>
    %98 = arith.mulf %97, %97 : vector<16x32xf32>
    %cst_23 = arith.constant dense<0.000000e+00> : vector<16xf32>
    %99 = vector.multi_reduction <add>, %98, %cst_23 [1] : vector<16x32xf32> to vector<16xf32>
    %100 = vector.shape_cast %99 : vector<16xf32> to vector<16x1xf32>
    %cst_24 = arith.constant 3.200000e+01 : f32
    %101 = vector.broadcast %cst_24 : f32 to vector<16x1xf32>
    %102 = arith.divf %100, %101 : vector<16x1xf32>
    %cst_25 = arith.constant 9.99999974E-6 : f32
    %103 = vector.broadcast %cst_25 : f32 to vector<16x1xf32>
    %104 = arith.addf %102, %103 : vector<16x1xf32>
    %105 = math.rsqrt %104 : vector<16x1xf32>
    %106 = vector.broadcast %105 : vector<16x1xf32> to vector<16x32xf32>
    %107 = vector.broadcast %14 : vector<1x32xf32> to vector<16x32xf32>
    %108 = arith.mulf %106, %107 : vector<16x32xf32>
    %109 = arith.mulf %97, %108 : vector<16x32xf32>
    %110 = vector.broadcast %15 : vector<1x32xf32> to vector<16x32xf32>
    %111 = arith.addf %109, %110 : vector<16x32xf32>
    %cst_26 = arith.constant dense<0.000000e+00> : vector<16x64xf32>
    %112 = tpu.matmul %111, %8, %cst_26 {dimension_numbers = #tpu.dot_dimension_numbers<[1], [0], [0], [1], [0, 0, 1, 1], [], []>} : vector<16x32xf32>, vector<32x64xf32>, vector<16x64xf32> -> vector<16x64xf32>
    %113 = vector.broadcast %12 : vector<1x64xf32> to vector<16x64xf32>
    %114 = arith.addf %112, %113 : vector<16x64xf32>
    %cst_27 = arith.constant 0.000000e+00 : f32
    %115 = vector.broadcast %cst_27 : f32 to vector<16x64xf32>
    %116 = arith.maximumf %114, %115 : vector<16x64xf32>
    %cst_28 = arith.constant dense<0.000000e+00> : vector<16x32xf32>
    %117 = tpu.matmul %116, %9, %cst_28 {dimension_numbers = #tpu.dot_dimension_numbers<[1], [0], [0], [1], [0, 0, 1, 1], [], []>} : vector<16x64xf32>, vector<64x32xf32>, vector<16x32xf32> -> vector<16x32xf32>
    %118 = vector.broadcast %13 : vector<1x32xf32> to vector<16x32xf32>
    %119 = arith.addf %117, %118 : vector<16x32xf32>
    %120 = arith.addf %111, %119 : vector<16x32xf32>
    %cst_29 = arith.constant dense<0.000000e+00> : vector<16xf32>
    %121 = vector.multi_reduction <add>, %120, %cst_29 [1] : vector<16x32xf32> to vector<16xf32>
    %122 = vector.shape_cast %121 : vector<16xf32> to vector<16x1xf32>
    %cst_30 = arith.constant 3.200000e+01 : f32
    %123 = vector.broadcast %cst_30 : f32 to vector<16x1xf32>
    %124 = arith.divf %122, %123 : vector<16x1xf32>
    %125 = vector.broadcast %124 : vector<16x1xf32> to vector<16x32xf32>
    %126 = arith.subf %120, %125 : vector<16x32xf32>
    %127 = arith.mulf %126, %126 : vector<16x32xf32>
    %cst_31 = arith.constant dense<0.000000e+00> : vector<16xf32>
    %128 = vector.multi_reduction <add>, %127, %cst_31 [1] : vector<16x32xf32> to vector<16xf32>
    %129 = vector.shape_cast %128 : vector<16xf32> to vector<16x1xf32>
    %cst_32 = arith.constant 3.200000e+01 : f32
    %130 = vector.broadcast %cst_32 : f32 to vector<16x1xf32>
    %131 = arith.divf %129, %130 : vector<16x1xf32>
    %cst_33 = arith.constant 9.99999974E-6 : f32
    %132 = vector.broadcast %cst_33 : f32 to vector<16x1xf32>
    %133 = arith.addf %131, %132 : vector<16x1xf32>
    %134 = math.rsqrt %133 : vector<16x1xf32>
    %135 = vector.broadcast %134 : vector<16x1xf32> to vector<16x32xf32>
    %136 = vector.broadcast %16 : vector<1x32xf32> to vector<16x32xf32>
    %137 = arith.mulf %135, %136 : vector<16x32xf32>
    %138 = arith.mulf %126, %137 : vector<16x32xf32>
    %139 = vector.broadcast %17 : vector<1x32xf32> to vector<16x32xf32>
    %140 = arith.addf %138, %139 : vector<16x32xf32>
    %141 = vector.extract_strided_slice %140 {offsets = [0, 0], sizes = [8, 32], strides = [1, 1]} : vector<16x32xf32> to vector<8x32xf32>
    %142 = vector.extract_strided_slice %140 {offsets = [8, 0], sizes = [8, 32], strides = [1, 1]} : vector<16x32xf32> to vector<8x32xf32>
    %143 = vector.shape_cast %141 : vector<8x32xf32> to vector<8x1x32xf32>
    %144 = vector.shape_cast %142 : vector<8x32xf32> to vector<8x1x32xf32>
    %145 = tpu.concatenate %143, %144 in 1 : vector<8x1x32xf32>, vector<8x1x32xf32> -> vector<8x2x32xf32>
    %c0_34 = arith.constant 0 : index
    %c0_35 = arith.constant 0 : index
    %c0_36 = arith.constant 0 : index
    %146 = vector.load %arg3[%c0_34, %c0_35, %c0_36] : memref<8x2x32xf32, #tpu.memory_space<vmem>>, vector<8x2x32xf32>
    tpu.vector_store %arg3[%c0_34, %c0_35, %c0_36], %145 {strides = array<i32>} : memref<8x2x32xf32, #tpu.memory_space<vmem>>, vector<8x2x32xf32>,
    return
  }
}

</mosaic_0001>

<llo_original>
// kernel: transformer_block.1
$region0: #{transformer_block.1}
  #allocation0 [shape = 'u32[]', space=smem, size = 0x4, offset = 0x4, fixed_abs, tag = 'smem constant byte address 0x4 - core index']
  #allocation1 [shape = 'u32[144,128]{1,0:T(1,128)}', space=vmem, size = 0x12000, scoped, tag = 'internal scratch']
  %s0 = inlined_call_operand.hbm [shape: f32[8,2,32], index: 0, kind: input, shape index: {}]
  %s1 = inlined_call_operand.hbm [shape: f32[160,128], index: 1, kind: input, shape index: {}]
  %s2 = inlined_call_operand.hbm [shape: f32[8,128], index: 2, kind: input, shape index: {}]
  %s3 = inlined_call_operand.hbm [shape: f32[8,2,32], index: 3, kind: output, shape index: {}]
  %s4 = sld [smem:[#allocation0]]
  $region34: #{transformer_block.1} parent=0
    _
  %s6 = ssub.s32 1, %s4
  %s7 = scalar_select 0, %s6, %s4
  $region1: #{transformer_block.1} parent=0
    #allocation2 [shape = 'u8[8192]{0}', space=vmem, size = 0x2000, scoped, tag = 'input window, operand 0, single buffered']
    #allocation3 [shape = 's32[1]{0}', space=sflag, size = 0x4, scoped, tag = 'scoped memory for transformer_block.1']
    #allocation4 [shape = 's32[1]{0}', space=sflag, size = 0x4, scoped, tag = 'scoped memory for transformer_block.1']
    #allocation5 [shape = 'u8[81920]{0}', space=vmem, size = 0x14000, scoped, tag = 'input window, operand 1, single buffered']
    #allocation6 [shape = 's32[1]{0}', space=sflag, size = 0x4, scoped, tag = 'scoped memory for transformer_block.1']
    #allocation7 [shape = 'u8[4096]{0}', space=vmem, size = 0x1000, scoped, tag = 'input window, operand 2, single buffered']
    #allocation8 [shape = 'u8[8192]{0}', space=vmem, size = 0x2000, scoped, tag = 'output window, operand 0, single buffered']
    %8 = vsyncpa [#allocation3], 0
    %9 = vsyncpa [#allocation6], 0
    %10 = vsyncpa [#allocation4], 0
    // Predicated region
    $region2: #{transformer_block.1} parent=1 // pred_check
      _
    $region3: #{transformer_block.1} parent=1 // pred_check_branch
      %12 = sbr.rel (0) target = $region5
    $region4: #{transformer_block.1} parent=1 // pred_region
      %s14 = ssub.s32 256, 256
      %15 = vsyncadd [#allocation3], %s14
      %s16 = sshll.u32 [#allocation2], 4
      %s17 = int_to_ptr.vmem [resolvable:$true] %s16
      %22 = dma.hbm_to_vmem [thread:$0]  %s0, 256, %s17, [#allocation3], 32, 32, 2
    $region5: #{transformer_block.1} parent=1 // pred_fallthru
      _
    // Predicated region
    $region6: #{transformer_block.1} parent=1 // pred_check
      _
    $region7: #{transformer_block.1} parent=1 // pred_check_branch
      %24 = sbr.rel (0) target = $region9
    $region8: #{transformer_block.1} parent=1 // pred_region
      %s26 = ssub.s32 2560, 2560
      %27 = vsyncadd [#allocation6], %s26
      %s28 = sshll.u32 [#allocation5], 4
      %s29 = int_to_ptr.vmem [resolvable:$true] %s28
      %34 = dma.hbm_to_vmem [thread:$0]  %s1, 2560, %s29, [#allocation6], 128, 128, 8
    $region9: #{transformer_block.1} parent=1 // pred_fallthru
      _
    // Predicated region
    $region10: #{transformer_block.1} parent=1 // pred_check
      _
    $region11: #{transformer_block.1} parent=1 // pred_check_branch
      %36 = sbr.rel (0) target = $region13
    $region12: #{transformer_block.1} parent=1 // pred_region
      %s38 = ssub.s32 128, 128
      %39 = vsyncadd [#allocation6], %s38
      %s41 = sshll.u32 [#allocation7], 4
      %s42 = int_to_ptr.vmem [resolvable:$true] %s41
      %44 = dma.hbm_to_vmem [thread:$0]  %s2, 128, %s42, [#allocation6]
    $region13: #{transformer_block.1} parent=1 // pred_fallthru
      _
    // Predicated region
    $region14: #{transformer_block.1} parent=1 // pred_check
      _
    $region15: #{transformer_block.1} parent=1 // pred_check_branch
      %46 = sbr.rel (0) target = $region17
    $region16: #{transformer_block.1} parent=1 // pred_region
      %47 = dma.done [#allocation3], 256
    $region17: #{transformer_block.1} parent=1 // pred_fallthru
      _
    // Predicated region
    $region18: #{transformer_block.1} parent=1 // pred_check
      _
    $region19: #{transformer_block.1} parent=1 // pred_check_branch
      %49 = sbr.rel (0) target = $region21
    $region20: #{transformer_block.1} parent=1 // pred_region
      %50 = dma.done [#allocation6], 2560
    $region21: #{transformer_block.1} parent=1 // pred_fallthru
      _
    // Predicated region
    $region22: #{transformer_block.1} parent=1 // pred_check
      _
    $region23: #{transformer_block.1} parent=1 // pred_check_branch
      %52 = sbr.rel (0) target = $region25
    $region24: #{transformer_block.1} parent=1 // pred_region
      %53 = dma.done [#allocation6], 128
    $region25: #{transformer_block.1} parent=1 // pred_fallthru
      _
    %v54 = vld [vmem:[#allocation2] sm:$0x3]
    %v55 = vld [vmem:[#allocation2 + $0x2] sm:$0x3]
    %v56 = vld [vmem:[#allocation2 + $0x4] sm:$0x3]
    %v57 = vld [vmem:[#allocation2 + $0x6] sm:$0x3]
    %v58 = vld [vmem:[#allocation2 + $0x8] sm:$0x3]
    %v59 = vld [vmem:[#allocation2 + $0xa] sm:$0x3]
    %v60 = vld [vmem:[#allocation2 + $0xc] sm:$0x3]
    %v61 = vld [vmem:[#allocation2 + $0xe] sm:$0x3]
    %v70 = vrot.slane %v55, 7
    %vm71 = vcmask 1041409
    %v72 = vsel %vm71, %v70, %v54
    %v73 = vrot.slane %v56, 6
    %vm74 = vcmask 1042434
    %v75 = vsel %vm74, %v73, %v72
    %v76 = vrot.slane %v57, 5
    %vm77 = vcmask 1043459
    %v78 = vsel %vm77, %v76, %v75
    %v79 = vrot.slane %v58, 4
    %vm80 = vcmask 1044484
    %v81 = vsel %vm80, %v79, %v78
    %v82 = vrot.slane %v59, 3
    %vm83 = vcmask 1045509
    %v84 = vsel %vm83, %v82, %v81
    %v85 = vrot.slane %v60, 2
    %vm86 = vcmask 1046534
    %v87 = vsel %vm86, %v85, %v84
    %v88 = vrot.slane %v61, 1
    %vm89 = vcmask 1047559
    %v90 = vsel %vm89, %v88, %v87
    %v92 = vrot.slane %v54, 1
    %v93 = vsel %vm71, %v55, %v92
    %v94 = vrot.slane %v56, 7
    %v95 = vsel %vm74, %v94, %v93
    %v96 = vrot.slane %v57, 6
    %v97 = vsel %vm77, %v96, %v95
    %v98 = vrot.slane %v58, 5
    %v99 = vsel %vm80, %v98, %v97
    %v100 = vrot.slane %v59, 4
    %v101 = vsel %vm83, %v100, %v99
    %v102 = vrot.slane %v60, 3
    %v103 = vsel %vm86, %v102, %v101
    %v104 = vrot.slane %v61, 2
    %v105 = vsel %vm89, %v104, %v103
    %v107 = vld [vmem:[#allocation5] sm:$0xff]
    %v108 = vld [vmem:[#allocation5 + $0x8] sm:$0xff]
    %v109 = vld [vmem:[#allocation5 + $0x10] sm:$0xff]
    %v110 = vld [vmem:[#allocation5 + $0x18] sm:$0xff]
    %v111 = vld [vmem:[#allocation5 + $0x20] sm:$0xff]
    %v112 = vld [vmem:[#allocation5 + $0x28] sm:$0xff]
    %v113 = vld [vmem:[#allocation5 + $0x30] sm:$0xff]
    %v114 = vld [vmem:[#allocation5 + $0x38] sm:$0xff]
    %v115 = vld [vmem:[#allocation5 + $0x40] sm:$0xff]
    %v116 = vld [vmem:[#allocation5 + $0x48] sm:$0xff]
    %v117 = vld [vmem:[#allocation5 + $0x50] sm:$0xff]
    %v118 = vld [vmem:[#allocation5 + $0x58] sm:$0xff]
    %v119 = vld [vmem:[#allocation5 + $0x60] sm:$0xff]
    %v120 = vld [vmem:[#allocation5 + $0x68] sm:$0xff]
    %v121 = vld [vmem:[#allocation5 + $0x70] sm:$0xff]
    %v122 = vld [vmem:[#allocation5 + $0x78] sm:$0xff]
    %v123 = vld [vmem:[#allocation5 + $0x80] sm:$0xff]
    %v124 = vld [vmem:[#allocation5 + $0x88] sm:$0xff]
    %v125 = vld [vmem:[#allocation5 + $0x90] sm:$0xff]
    %v126 = vld [vmem:[#allocation5 + $0x98] sm:$0xff]
    %v127 = vld [vmem:[#allocation7] sm:$0x1]
    %v128 = vld [vmem:[#allocation7 + $0x1] sm:$0x1]
    %v129 = vld [vmem:[#allocation7 + $0x2] sm:$0x1]
    %v130 = vld [vmem:[#allocation7 + $0x3] sm:$0x1]
    %v131 = vld [vmem:[#allocation7 + $0x4] sm:$0x1]
    %v132 = vld [vmem:[#allocation7 + $0x5] sm:$0x1]
    %v133 = vld [vmem:[#allocation7 + $0x6] sm:$0x1]
    %v134 = vld [vmem:[#allocation7 + $0x7] sm:$0x1]
    %v135 = vlaneseq
    %v136 = vshrl.u32 %v135, 7
    %v137 = vsub.s32 0, %v136
    %v138 = vrot.slane %v127, %v137
    %vm139 = vcmask 261120
    %v140 = vsel %vm139, %v90, 0
    %v142 = vsel %vm139, %v105, 0
    %144 = vmatprep.subr.mxu0 0.0
    %145 = vmatpush1.msra.mxu0 %v107
    %146 = vmatprep.subr.mxu0 0.0
    %147 = vmatpush1.msra.mxu0 %v108
    %148 = vmatprep.subr.mxu0 0.0
    %149 = vmatpush1.msra.mxu0 %v109
    %150 = vmatprep.subr.mxu0 0.0
    %151 = vmatpush1.msra.mxu0 %v110
    %152 = vmatprep.subr.mxu0 0.0
    %153 = vmatpush1.msra.mxu0 0.0
    %154 = vmatprep.subr.mxu0 0.0
    %155 = vmatpush1.msra.mxu0 0.0
    %156 = vmatprep.subr.mxu0 0.0
    %157 = vmatpush1.msra.mxu0 0.0
    %158 = vmatprep.subr.mxu0 0.0
    %159 = vmatpush1.msra.mxu0 0.0
    %160 = vmatprep.subr.mxu0 0.0
    %161 = vmatpush1.msra.mxu0 0.0
    %162 = vmatprep.subr.mxu0 0.0
    %163 = vmatpush1.msra.mxu0 0.0
    %164 = vmatprep.subr.mxu0 0.0
    %165 = vmatpush1.msra.mxu0 0.0
    %166 = vmatprep.subr.mxu0 0.0
    %167 = vmatpush1.msra.mxu0 0.0
    %168 = vmatprep.subr.mxu0 0.0
    %169 = vmatpush1.msra.mxu0 0.0
    %170 = vmatprep.subr.mxu0 0.0
    %171 = vmatpush1.msra.mxu0 0.0
    %172 = vmatprep.subr.mxu0 0.0
    %173 = vmatpush1.msra.mxu0 0.0
    %174 = vmatprep.subr.mxu0 0.0
    %175 = vmatpush1.msra.mxu0 0.0
    %176 = vmatprep.subr.mxu0 0.0
    %177 = vmatpush1.msra.mxu0 0.0
    %178 = vmatprep.subr.mxu0 0.0
    %179 = vmatpush1.msra.mxu0 0.0
    %180 = vmatprep.subr.mxu0 0.0
    %181 = vmatpush1.msra.mxu0 0.0
    %182 = vmatprep.subr.mxu0 0.0
    %183 = vmatpush1.msra.mxu0 0.0
    %184 = vmatprep.subr.mxu0 0.0
    %185 = vmatpush1.msra.mxu0 0.0
    %186 = vmatprep.subr.mxu0 0.0
    %187 = vmatpush1.msra.mxu0 0.0
    %188 = vmatprep.subr.mxu0 0.0
    %189 = vmatpush1.msra.mxu0 0.0
    %190 = vmatprep.subr.mxu0 0.0
    %191 = vmatpush1.msra.mxu0 0.0
    %192 = vmatprep.subr.mxu0 0.0
    %193 = vmatpush1.msra.mxu0 0.0
    %194 = vmatprep.subr.mxu0 0.0
    %195 = vmatpush1.msra.mxu0 0.0
    %196 = vmatprep.subr.mxu0 0.0
    %197 = vmatpush1.msra.mxu0 0.0
    %198 = vmatprep.subr.mxu0 0.0
    %199 = vmatpush1.msra.mxu0 0.0
    %200 = vmatprep.subr.mxu0 0.0
    %201 = vmatpush1.msra.mxu0 0.0
    %202 = vmatprep.subr.mxu0 0.0
    %203 = vmatpush1.msra.mxu0 0.0
    %204 = vmatprep.subr.mxu0 0.0
    %205 = vmatpush1.msra.mxu0 0.0
    %206 = vmatprep.subr.mxu0 0.0
    %207 = vmatpush1.msra.mxu0 0.0
    %208 = vmatprep.mubr.f32.mxu0 0.0
    %209 = vmatmul.mubr.f32.gmra.mrb[0].mxu0 %v140
    %v210 = vpop.f32.mrb[0].mxu0
    %v211 = vadd.f32 %v138, %v210
    %v212 = vpop.f32.mrb[0].mxu0
    %213 = vmatprep.mubr.f32.mxu0 0.0
    %214 = vmatmul.mubr.f32.gmra.mrb[0].mxu0 %v142
    %v215 = vpop.f32.mrb[0].mxu0
    %v216 = vadd.f32 %v138, %v215
    %v217 = vpop.f32.mrb[0].mxu0
    %218 = vdwg.mxu0
    %221 = vrot.lane.b32.xlu0 %v211, 120
    %v222 = vpop.permute.xlu0 %221
    %223 = vrot.lane.b32.xlu0 %v216, 120
    %v224 = vpop.permute.xlu0 %223
    %225 = vrot.lane.b32.xlu0 %v211, 112
    %v226 = vpop.permute.xlu0 %225
    %227 = vrot.lane.b32.xlu0 %v216, 112
    %v228 = vpop.permute.xlu0 %227
    %229 = vrot.lane.b32.xlu0 %v211, 104
    %v230 = vpop.permute.xlu0 %229
    %231 = vrot.lane.b32.xlu0 %v216, 104
    %v232 = vpop.permute.xlu0 %231
    %233 = vrot.lane.b32.xlu0 %v211, 96
    %v234 = vpop.permute.xlu0 %233
    %vm235 = vcmask 64512
    %v236 = vsel %vm235, %v211, 0
    %v238 = vsel %vm235, %v234, 0
    %240 = vmatprep.subr.mxu0 0.0
    %241 = vmatpush1.xpose.msra.mxu0 %v238
    %242 = vmatprep.subr.mxu0 0.0
    %243 = vmatpush1.xpose.msra.mxu0 0.0
    %244 = vmatprep.subr.mxu0 0.0
    %245 = vmatpush1.xpose.msra.mxu0 0.0
    %246 = vmatprep.subr.mxu0 0.0
    %247 = vmatpush1.xpose.msra.mxu0 0.0
    %248 = vmatprep.subr.mxu0 0.0
    %249 = vmatpush1.xpose.msra.mxu0 0.0
    %250 = vmatprep.subr.mxu0 0.0
    %251 = vmatpush1.xpose.msra.mxu0 0.0
    %252 = vmatprep.subr.mxu0 0.0
    %253 = vmatpush1.xpose.msra.mxu0 0.0
    %254 = vmatprep.subr.mxu0 0.0
    %255 = vmatpush1.xpose.msra.mxu0 0.0
    %256 = vmatprep.subr.mxu0 0.0
    %257 = vmatpush1.xpose.msra.mxu0 0.0
    %258 = vmatprep.subr.mxu0 0.0
    %259 = vmatpush1.xpose.msra.mxu0 0.0
    %260 = vmatprep.subr.mxu0 0.0
    %261 = vmatpush1.xpose.msra.mxu0 0.0
    %262 = vmatprep.subr.mxu0 0.0
    %263 = vmatpush1.xpose.msra.mxu0 0.0
    %264 = vmatprep.subr.mxu0 0.0
    %265 = vmatpush1.xpose.msra.mxu0 0.0
    %266 = vmatprep.subr.mxu0 0.0
    %267 = vmatpush1.xpose.msra.mxu0 0.0
    %268 = vmatprep.subr.mxu0 0.0
    %269 = vmatpush1.xpose.msra.mxu0 0.0
    %270 = vmatprep.subr.mxu0 0.0
    %271 = vmatpush1.xpose.msra.mxu0 0.0
    %272 = vmatprep.subr.mxu0 0.0
    %273 = vmatpush1.xpose.msra.mxu0 0.0
    %274 = vmatprep.subr.mxu0 0.0
    %275 = vmatpush1.xpose.msra.mxu0 0.0
    %276 = vmatprep.subr.mxu0 0.0
    %277 = vmatpush1.xpose.msra.mxu0 0.0
    %278 = vmatprep.subr.mxu0 0.0
    %279 = vmatpush1.xpose.msra.mxu0 0.0
    %280 = vmatprep.subr.mxu0 0.0
    %281 = vmatpush1.xpose.msra.mxu0 0.0
    %282 = vmatprep.subr.mxu0 0.0
    %283 = vmatpush1.xpose.msra.mxu0 0.0
    %284 = vmatprep.subr.mxu0 0.0
    %285 = vmatpush1.xpose.msra.mxu0 0.0
    %286 = vmatprep.subr.mxu0 0.0
    %287 = vmatpush1.xpose.msra.mxu0 0.0
    %288 = vmatprep.subr.mxu0 0.0
    %289 = vmatpush1.xpose.msra.mxu0 0.0
    %290 = vmatprep.subr.mxu0 0.0
    %291 = vmatpush1.xpose.msra.mxu0 0.0
    %292 = vmatprep.subr.mxu0 0.0
    %293 = vmatpush1.xpose.msra.mxu0 0.0
    %294 = vmatprep.subr.mxu0 0.0
    %295 = vmatpush1.xpose.msra.mxu0 0.0
    %296 = vmatprep.subr.mxu0 0.0
    %297 = vmatpush1.xpose.msra.mxu0 0.0
    %298 = vmatprep.subr.mxu0 0.0
    %299 = vmatpush1.xpose.msra.mxu0 0.0
    %300 = vmatprep.subr.mxu0 0.0
    %301 = vmatpush1.xpose.msra.mxu0 0.0
    %302 = vmatprep.subr.mxu0 0.0
    %303 = vmatpush1.xpose.msra.mxu0 0.0
    %304 = vmatprep.mubr.f32.mxu0 0.0
    %305 = vmatmul.mubr.f32.gmra.mrb[0].mxu0 %v236
    %v306 = vpop.f32.mrb[0].mxu0
    %v307 = vadd.f32 0.0, %v306
    %v308 = vpop.f32.mrb[0].mxu0
    %309 = vdwg.mxu0
    %310 = vrot.lane.b32.xlu0 %v216, 96
    %v311 = vpop.permute.xlu0 %310
    %v312 = vsel %vm235, %v216, 0
    %v314 = vsel %vm235, %v311, 0
    %316 = vmatprep.subr.mxu0 0.0
    %317 = vmatpush1.xpose.msra.mxu0 %v314
    %318 = vmatprep.subr.mxu0 0.0
    %319 = vmatpush1.xpose.msra.mxu0 0.0
    %320 = vmatprep.subr.mxu0 0.0
    %321 = vmatpush1.xpose.msra.mxu0 0.0
    %322 = vmatprep.subr.mxu0 0.0
    %323 = vmatpush1.xpose.msra.mxu0 0.0
    %324 = vmatprep.subr.mxu0 0.0
    %325 = vmatpush1.xpose.msra.mxu0 0.0
    %326 = vmatprep.subr.mxu0 0.0
    %327 = vmatpush1.xpose.msra.mxu0 0.0
    %328 = vmatprep.subr.mxu0 0.0
    %329 = vmatpush1.xpose.msra.mxu0 0.0
    %330 = vmatprep.subr.mxu0 0.0
    %331 = vmatpush1.xpose.msra.mxu0 0.0
    %332 = vmatprep.subr.mxu0 0.0
    %333 = vmatpush1.xpose.msra.mxu0 0.0
    %334 = vmatprep.subr.mxu0 0.0
    %335 = vmatpush1.xpose.msra.mxu0 0.0
    %336 = vmatprep.subr.mxu0 0.0
    %337 = vmatpush1.xpose.msra.mxu0 0.0
    %338 = vmatprep.subr.mxu0 0.0
    %339 = vmatpush1.xpose.msra.mxu0 0.0
    %340 = vmatprep.subr.mxu0 0.0
    %341 = vmatpush1.xpose.msra.mxu0 0.0
    %342 = vmatprep.subr.mxu0 0.0
    %343 = vmatpush1.xpose.msra.mxu0 0.0
    %344 = vmatprep.subr.mxu0 0.0
    %345 = vmatpush1.xpose.msra.mxu0 0.0
    %346 = vmatprep.subr.mxu0 0.0
    %347 = vmatpush1.xpose.msra.mxu0 0.0
    %348 = vmatprep.subr.mxu0 0.0
    %349 = vmatpush1.xpose.msra.mxu0 0.0
    %350 = vmatprep.subr.mxu0 0.0
    %351 = vmatpush1.xpose.msra.mxu0 0.0
    %352 = vmatprep.subr.mxu0 0.0
    %353 = vmatpush1.xpose.msra.mxu0 0.0
    %354 = vmatprep.subr.mxu0 0.0
    %355 = vmatpush1.xpose.msra.mxu0 0.0
    %356 = vmatprep.subr.mxu0 0.0
    %357 = vmatpush1.xpose.msra.mxu0 0.0
    %358 = vmatprep.subr.mxu0 0.0
    %359 = vmatpush1.xpose.msra.mxu0 0.0
    %360 = vmatprep.subr.mxu0 0.0
    %361 = vmatpush1.xpose.msra.mxu0 0.0
    %362 = vmatprep.subr.mxu0 0.0
    %363 = vmatpush1.xpose.msra.mxu0 0.0
    %364 = vmatprep.subr.mxu0 0.0
    %365 = vmatpush1.xpose.msra.mxu0 0.0
    %366 = vmatprep.subr.mxu0 0.0
    %367 = vmatpush1.xpose.msra.mxu0 0.0
    %368 = vmatprep.subr.mxu0 0.0
    %369 = vmatpush1.xpose.msra.mxu0 0.0
    %370 = vmatprep.subr.mxu0 0.0
    %371 = vmatpush1.xpose.msra.mxu0 0.0
    %372 = vmatprep.subr.mxu0 0.0
    %373 = vmatpush1.xpose.msra.mxu0 0.0
    %374 = vmatprep.subr.mxu0 0.0
    %375 = vmatpush1.xpose.msra.mxu0 0.0
    %376 = vmatprep.subr.mxu0 0.0
    %377 = vmatpush1.xpose.msra.mxu0 0.0
    %378 = vmatprep.subr.mxu0 0.0
    %379 = vmatpush1.xpose.msra.mxu0 0.0
    %380 = vmatprep.mubr.f32.mxu0 0.0
    %381 = vmatmul.mubr.f32.gmra.mrb[0].mxu0 %v312
    %v382 = vpop.f32.mrb[0].mxu0
    %v383 = vadd.f32 0.0, %v382
    %v384 = vpop.f32.mrb[0].mxu0
    %385 = vdwg.mxu0
    %386 = vrot.lane.b32.xlu0 %v222, 96
    %v387 = vpop.permute.xlu0 %386
    %v388 = vsel %vm235, %v222, 0
    %v390 = vsel %vm235, %v387, 0
    %392 = vmatprep.subr.mxu0 0.0
    %393 = vmatpush1.xpose.msra.mxu0 %v390
    %394 = vmatprep.subr.mxu0 0.0
    %395 = vmatpush1.xpose.msra.mxu0 0.0
    %396 = vmatprep.subr.mxu0 0.0
    %397 = vmatpush1.xpose.msra.mxu0 0.0
    %398 = vmatprep.subr.mxu0 0.0
    %399 = vmatpush1.xpose.msra.mxu0 0.0
    %400 = vmatprep.subr.mxu0 0.0
    %401 = vmatpush1.xpose.msra.mxu0 0.0
    %402 = vmatprep.subr.mxu0 0.0
    %403 = vmatpush1.xpose.msra.mxu0 0.0
    %404 = vmatprep.subr.mxu0 0.0
    %405 = vmatpush1.xpose.msra.mxu0 0.0
    %406 = vmatprep.subr.mxu0 0.0
    %407 = vmatpush1.xpose.msra.mxu0 0.0
    %408 = vmatprep.subr.mxu0 0.0
    %409 = vmatpush1.xpose.msra.mxu0 0.0
    %410 = vmatprep.subr.mxu0 0.0
    %411 = vmatpush1.xpose.msra.mxu0 0.0
    %412 = vmatprep.subr.mxu0 0.0
    %413 = vmatpush1.xpose.msra.mxu0 0.0
    %414 = vmatprep.subr.mxu0 0.0
    %415 = vmatpush1.xpose.msra.mxu0 0.0
    %416 = vmatprep.subr.mxu0 0.0
    %417 = vmatpush1.xpose.msra.mxu0 0.0
    %418 = vmatprep.subr.mxu0 0.0
    %419 = vmatpush1.xpose.msra.mxu0 0.0
    %420 = vmatprep.subr.mxu0 0.0
    %421 = vmatpush1.xpose.msra.mxu0 0.0
    %422 = vmatprep.subr.mxu0 0.0
    %423 = vmatpush1.xpose.msra.mxu0 0.0
    %424 = vmatprep.subr.mxu0 0.0
    %425 = vmatpush1.xpose.msra.mxu0 0.0
    %426 = vmatprep.subr.mxu0 0.0
    %427 = vmatpush1.xpose.msra.mxu0 0.0
    %428 = vmatprep.subr.mxu0 0.0
    %429 = vmatpush1.xpose.msra.mxu0 0.0
    %430 = vmatprep.subr.mxu0 0.0
    %431 = vmatpush1.xpose.msra.mxu0 0.0
    %432 = vmatprep.subr.mxu0 0.0
    %433 = vmatpush1.xpose.msra.mxu0 0.0
    %434 = vmatprep.subr.mxu0 0.0
    %435 = vmatpush1.xpose.msra.mxu0 0.0
    %436 = vmatprep.subr.mxu0 0.0
    %437 = vmatpush1.xpose.msra.mxu0 0.0
    %438 = vmatprep.subr.mxu0 0.0
    %439 = vmatpush1.xpose.msra.mxu0 0.0
    %440 = vmatprep.subr.mxu0 0.0
    %441 = vmatpush1.xpose.msra.mxu0 0.0
    %442 = vmatprep.subr.mxu0 0.0
    %443 = vmatpush1.xpose.msra.mxu0 0.0
    %444 = vmatprep.subr.mxu0 0.0
    %445 = vmatpush1.xpose.msra.mxu0 0.0
    %446 = vmatprep.subr.mxu0 0.0
    %447 = vmatpush1.xpose.msra.mxu0 0.0
    %448 = vmatprep.subr.mxu0 0.0
    %449 = vmatpush1.xpose.msra.mxu0 0.0
    %450 = vmatprep.subr.mxu0 0.0
    %451 = vmatpush1.xpose.msra.mxu0 0.0
    %452 = vmatprep.subr.mxu0 0.0
    %453 = vmatpush1.xpose.msra.mxu0 0.0
    %454 = vmatprep.subr.mxu0 0.0
    %455 = vmatpush1.xpose.msra.mxu0 0.0
    %456 = vmatprep.mubr.f32.mxu0 0.0
    %457 = vmatmul.mubr.f32.gmra.mrb[0].mxu0 %v388
    %v458 = vpop.f32.mrb[0].mxu0
    %v459 = vadd.f32 0.0, %v458
    %v460 = vpop.f32.mrb[0].mxu0
    %461 = vdwg.mxu0
    %462 = vrot.lane.b32.xlu0 %v224, 96
    %v463 = vpop.permute.xlu0 %462
    %v464 = vsel %vm235, %v224, 0
    %v466 = vsel %vm235, %v463, 0
    %468 = vmatprep.subr.mxu0 0.0
    %469 = vmatpush1.xpose.msra.mxu0 %v466
    %470 = vmatprep.subr.mxu0 0.0
    %471 = vmatpush1.xpose.msra.mxu0 0.0
    %472 = vmatprep.subr.mxu0 0.0
    %473 = vmatpush1.xpose.msra.mxu0 0.0
    %474 = vmatprep.subr.mxu0 0.0
    %475 = vmatpush1.xpose.msra.mxu0 0.0
    %476 = vmatprep.subr.mxu0 0.0
    %477 = vmatpush1.xpose.msra.mxu0 0.0
    %478 = vmatprep.subr.mxu0 0.0
    %479 = vmatpush1.xpose.msra.mxu0 0.0
    %480 = vmatprep.subr.mxu0 0.0
    %481 = vmatpush1.xpose.msra.mxu0 0.0
    %482 = vmatprep.subr.mxu0 0.0
    %483 = vmatpush1.xpose.msra.mxu0 0.0
    %484 = vmatprep.subr.mxu0 0.0
    %485 = vmatpush1.xpose.msra.mxu0 0.0
    %486 = vmatprep.subr.mxu0 0.0
    %487 = vmatpush1.xpose.msra.mxu0 0.0
    %488 = vmatprep.subr.mxu0 0.0
    %489 = vmatpush1.xpose.msra.mxu0 0.0
    %490 = vmatprep.subr.mxu0 0.0
    %491 = vmatpush1.xpose.msra.mxu0 0.0
    %492 = vmatprep.subr.mxu0 0.0
    %493 = vmatpush1.xpose.msra.mxu0 0.0
    %494 = vmatprep.subr.mxu0 0.0
    %495 = vmatpush1.xpose.msra.mxu0 0.0
    %496 = vmatprep.subr.mxu0 0.0
    %497 = vmatpush1.xpose.msra.mxu0 0.0
    %498 = vmatprep.subr.mxu0 0.0
    %499 = vmatpush1.xpose.msra.mxu0 0.0
    %500 = vmatprep.subr.mxu0 0.0
    %501 = vmatpush1.xpose.msra.mxu0 0.0
    %502 = vmatprep.subr.mxu0 0.0
    %503 = vmatpush1.xpose.msra.mxu0 0.0
    %504 = vmatprep.subr.mxu0 0.0
    %505 = vmatpush1.xpose.msra.mxu0 0.0
    %506 = vmatprep.subr.mxu0 0.0
    %507 = vmatpush1.xpose.msra.mxu0 0.0
    %508 = vmatprep.subr.mxu0 0.0
    %509 = vmatpush1.xpose.msra.mxu0 0.0
    %510 = vmatprep.subr.mxu0 0.0
    %511 = vmatpush1.xpose.msra.mxu0 0.0
    %512 = vmatprep.subr.mxu0 0.0
    %513 = vmatpush1.xpose.msra.mxu0 0.0
    %514 = vmatprep.subr.mxu0 0.0
    %515 = vmatpush1.xpose.msra.mxu0 0.0
    %516 = vmatprep.subr.mxu0 0.0
    %517 = vmatpush1.xpose.msra.mxu0 0.0
    %518 = vmatprep.subr.mxu0 0.0
    %519 = vmatpush1.xpose.msra.mxu0 0.0
    %520 = vmatprep.subr.mxu0 0.0
    %521 = vmatpush1.xpose.msra.mxu0 0.0
    %522 = vmatprep.subr.mxu0 0.0
    %523 = vmatpush1.xpose.msra.mxu0 0.0
    %524 = vmatprep.subr.mxu0 0.0
    %525 = vmatpush1.xpose.msra.mxu0 0.0
    %526 = vmatprep.subr.mxu0 0.0
    %527 = vmatpush1.xpose.msra.mxu0 0.0
    %528 = vmatprep.subr.mxu0 0.0
    %529 = vmatpush1.xpose.msra.mxu0 0.0
    %530 = vmatprep.subr.mxu0 0.0
    %531 = vmatpush1.xpose.msra.mxu0 0.0
    %532 = vmatprep.mubr.f32.mxu0 0.0
    %533 = vmatmul.mubr.f32.gmra.mrb[0].mxu0 %v464
    %v534 = vpop.f32.mrb[0].mxu0
    %v535 = vadd.f32 0.0, %v534
    %v536 = vpop.f32.mrb[0].mxu0
    %537 = vdwg.mxu0
    %538 = vrot.lane.b32.xlu0 %v226, 96
    %v539 = vpop.permute.xlu0 %538
    %v540 = vsel %vm235, %v226, 0
    %v542 = vsel %vm235, %v539, 0
    %544 = vmatprep.subr.mxu0 0.0
    %545 = vmatpush1.xpose.msra.mxu0 %v542
    %546 = vmatprep.subr.mxu0 0.0
    %547 = vmatpush1.xpose.msra.mxu0 0.0
    %548 = vmatprep.subr.mxu0 0.0
    %549 = vmatpush1.xpose.msra.mxu0 0.0
    %550 = vmatprep.subr.mxu0 0.0
    %551 = vmatpush1.xpose.msra.mxu0 0.0
    %552 = vmatprep.subr.mxu0 0.0
    %553 = vmatpush1.xpose.msra.mxu0 0.0
    %554 = vmatprep.subr.mxu0 0.0
    %555 = vmatpush1.xpose.msra.mxu0 0.0
    %556 = vmatprep.subr.mxu0 0.0
    %557 = vmatpush1.xpose.msra.mxu0 0.0
    %558 = vmatprep.subr.mxu0 0.0
    %559 = vmatpush1.xpose.msra.mxu0 0.0
    %560 = vmatprep.subr.mxu0 0.0
    %561 = vmatpush1.xpose.msra.mxu0 0.0
    %562 = vmatprep.subr.mxu0 0.0
    %563 = vmatpush1.xpose.msra.mxu0 0.0
    %564 = vmatprep.subr.mxu0 0.0
    %565 = vmatpush1.xpose.msra.mxu0 0.0
    %566 = vmatprep.subr.mxu0 0.0
    %567 = vmatpush1.xpose.msra.mxu0 0.0
    %568 = vmatprep.subr.mxu0 0.0
    %569 = vmatpush1.xpose.msra.mxu0 0.0
    %570 = vmatprep.subr.mxu0 0.0
    %571 = vmatpush1.xpose.msra.mxu0 0.0
    %572 = vmatprep.subr.mxu0 0.0
    %573 = vmatpush1.xpose.msra.mxu0 0.0
    %574 = vmatprep.subr.mxu0 0.0
    %575 = vmatpush1.xpose.msra.mxu0 0.0
    %576 = vmatprep.subr.mxu0 0.0
    %577 = vmatpush1.xpose.msra.mxu0 0.0
    %578 = vmatprep.subr.mxu0 0.0
    %579 = vmatpush1.xpose.msra.mxu0 0.0
    %580 = vmatprep.subr.mxu0 0.0
    %581 = vmatpush1.xpose.msra.mxu0 0.0
    %582 = vmatprep.subr.mxu0 0.0
    %583 = vmatpush1.xpose.msra.mxu0 0.0
    %584 = vmatprep.subr.mxu0 0.0
    %585 = vmatpush1.xpose.msra.mxu0 0.0
    %586 = vmatprep.subr.mxu0 0.0
    %587 = vmatpush1.xpose.msra.mxu0 0.0
    %588 = vmatprep.subr.mxu0 0.0
    %589 = vmatpush1.xpose.msra.mxu0 0.0
    %590 = vmatprep.subr.mxu0 0.0
    %591 = vmatpush1.xpose.msra.mxu0 0.0
    %592 = vmatprep.subr.mxu0 0.0
    %593 = vmatpush1.xpose.msra.mxu0 0.0
    %594 = vmatprep.subr.mxu0 0.0
    %595 = vmatpush1.xpose.msra.mxu0 0.0
    %596 = vmatprep.subr.mxu0 0.0
    %597 = vmatpush1.xpose.msra.mxu0 0.0
    %598 = vmatprep.subr.mxu0 0.0
    %599 = vmatpush1.xpose.msra.mxu0 0.0
    %600 = vmatprep.subr.mxu0 0.0
    %601 = vmatpush1.xpose.msra.mxu0 0.0
    %602 = vmatprep.subr.mxu0 0.0
    %603 = vmatpush1.xpose.msra.mxu0 0.0
    %604 = vmatprep.subr.mxu0 0.0
    %605 = vmatpush1.xpose.msra.mxu0 0.0
    %606 = vmatprep.subr.mxu0 0.0
    %607 = vmatpush1.xpose.msra.mxu0 0.0
    %608 = vmatprep.mubr.f32.mxu0 0.0
    %609 = vmatmul.mubr.f32.gmra.mrb[0].mxu0 %v540
    %v610 = vpop.f32.mrb[0].mxu0
    %v611 = vadd.f32 0.0, %v610
    %v612 = vpop.f32.mrb[0].mxu0
    %613 = vdwg.mxu0
    %614 = vrot.lane.b32.xlu0 %v228, 96
    %v615 = vpop.permute.xlu0 %614
    %v616 = vsel %vm235, %v228, 0
    %v618 = vsel %vm235, %v615, 0
    %620 = vmatprep.subr.mxu0 0.0
    %621 = vmatpush1.xpose.msra.mxu0 %v618
    %622 = vmatprep.subr.mxu0 0.0
    %623 = vmatpush1.xpose.msra.mxu0 0.0
    %624 = vmatprep.subr.mxu0 0.0
    %625 = vmatpush1.xpose.msra.mxu0 0.0
    %626 = vmatprep.subr.mxu0 0.0
    %627 = vmatpush1.xpose.msra.mxu0 0.0
    %628 = vmatprep.subr.mxu0 0.0
    %629 = vmatpush1.xpose.msra.mxu0 0.0
    %630 = vmatprep.subr.mxu0 0.0
    %631 = vmatpush1.xpose.msra.mxu0 0.0
    %632 = vmatprep.subr.mxu0 0.0
    %633 = vmatpush1.xpose.msra.mxu0 0.0
    %634 = vmatprep.subr.mxu0 0.0
    %635 = vmatpush1.xpose.msra.mxu0 0.0
    %636 = vmatprep.subr.mxu0 0.0
    %637 = vmatpush1.xpose.msra.mxu0 0.0
    %638 = vmatprep.subr.mxu0 0.0
    %639 = vmatpush1.xpose.msra.mxu0 0.0
    %640 = vmatprep.subr.mxu0 0.0
    %641 = vmatpush1.xpose.msra.mxu0 0.0
    %642 = vmatprep.subr.mxu0 0.0
    %643 = vmatpush1.xpose.msra.mxu0 0.0
    %644 = vmatprep.subr.mxu0 0.0
    %645 = vmatpush1.xpose.msra.mxu0 0.0
    %646 = vmatprep.subr.mxu0 0.0
    %647 = vmatpush1.xpose.msra.mxu0 0.0
    %648 = vmatprep.subr.mxu0 0.0
    %649 = vmatpush1.xpose.msra.mxu0 0.0
    %650 = vmatprep.subr.mxu0 0.0
    %651 = vmatpush1.xpose.msra.mxu0 0.0
    %652 = vmatprep.subr.mxu0 0.0
    %653 = vmatpush1.xpose.msra.mxu0 0.0
    %654 = vmatprep.subr.mxu0 0.0
    %655 = vmatpush1.xpose.msra.mxu0 0.0
    %656 = vmatprep.subr.mxu0 0.0
    %657 = vmatpush1.xpose.msra.mxu0 0.0
    %658 = vmatprep.subr.mxu0 0.0
    %659 = vmatpush1.xpose.msra.mxu0 0.0
    %660 = vmatprep.subr.mxu0 0.0
    %661 = vmatpush1.xpose.msra.mxu0 0.0
    %662 = vmatprep.subr.mxu0 0.0
    %663 = vmatpush1.xpose.msra.mxu0 0.0
    %664 = vmatprep.subr.mxu0 0.0
    %665 = vmatpush1.xpose.msra.mxu0 0.0
    %666 = vmatprep.subr.mxu0 0.0
    %667 = vmatpush1.xpose.msra.mxu0 0.0
    %668 = vmatprep.subr.mxu0 0.0
    %669 = vmatpush1.xpose.msra.mxu0 0.0
    %670 = vmatprep.subr.mxu0 0.0
    %671 = vmatpush1.xpose.msra.mxu0 0.0
    %672 = vmatprep.subr.mxu0 0.0
    %673 = vmatpush1.xpose.msra.mxu0 0.0
    %674 = vmatprep.subr.mxu0 0.0
    %675 = vmatpush1.xpose.msra.mxu0 0.0
    %676 = vmatprep.subr.mxu0 0.0
    %677 = vmatpush1.xpose.msra.mxu0 0.0
    %678 = vmatprep.subr.mxu0 0.0
    %679 = vmatpush1.xpose.msra.mxu0 0.0
    %680 = vmatprep.subr.mxu0 0.0
    %681 = vmatpush1.xpose.msra.mxu0 0.0
    %682 = vmatprep.subr.mxu0 0.0
    %683 = vmatpush1.xpose.msra.mxu0 0.0
    %684 = vmatprep.mubr.f32.mxu0 0.0
    %685 = vmatmul.mubr.f32.gmra.mrb[0].mxu0 %v616
    %v686 = vpop.f32.mrb[0].mxu0
    %v687 = vadd.f32 0.0, %v686
    %v688 = vpop.f32.mrb[0].mxu0
    %689 = vdwg.mxu0
    %690 = vrot.lane.b32.xlu0 %v230, 96
    %v691 = vpop.permute.xlu0 %690
    %v692 = vsel %vm235, %v230, 0
    %v694 = vsel %vm235, %v691, 0
    %696 = vmatprep.subr.mxu0 0.0
    %697 = vmatpush1.xpose.msra.mxu0 %v694
    %698 = vmatprep.subr.mxu0 0.0
    %699 = vmatpush1.xpose.msra.mxu0 0.0
    %700 = vmatprep.subr.mxu0 0.0
    %701 = vmatpush1.xpose.msra.mxu0 0.0
    %702 = vmatprep.subr.mxu0 0.0
    %703 = vmatpush1.xpose.msra.mxu0 0.0
    %704 = vmatprep.subr.mxu0 0.0
    %705 = vmatpush1.xpose.msra.mxu0 0.0
    %706 = vmatprep.subr.mxu0 0.0
    %707 = vmatpush1.xpose.msra.mxu0 0.0
    %708 = vmatprep.subr.mxu0 0.0
    %709 = vmatpush1.xpose.msra.mxu0 0.0
    %710 = vmatprep.subr.mxu0 0.0
    %711 = vmatpush1.xpose.msra.mxu0 0.0
    %712 = vmatprep.subr.mxu0 0.0
    %713 = vmatpush1.xpose.msra.mxu0 0.0
    %714 = vmatprep.subr.mxu0 0.0
    %715 = vmatpush1.xpose.msra.mxu0 0.0
    %716 = vmatprep.subr.mxu0 0.0
    %717 = vmatpush1.xpose.msra.mxu0 0.0
    %718 = vmatprep.subr.mxu0 0.0
    %719 = vmatpush1.xpose.msra.mxu0 0.0
    %720 = vmatprep.subr.mxu0 0.0
    %721 = vmatpush1.xpose.msra.mxu0 0.0
    %722 = vmatprep.subr.mxu0 0.0
    %723 = vmatpush1.xpose.msra.mxu0 0.0
    %724 = vmatprep.subr.mxu0 0.0
    %725 = vmatpush1.xpose.msra.mxu0 0.0
    %726 = vmatprep.subr.mxu0 0.0
    %727 = vmatpush1.xpose.msra.mxu0 0.0
    %728 = vmatprep.subr.mxu0 0.0
    %729 = vmatpush1.xpose.msra.mxu0 0.0
    %730 = vmatprep.subr.mxu0 0.0
    %731 = vmatpush1.xpose.msra.mxu0 0.0
    %732 = vmatprep.subr.mxu0 0.0
    %733 = vmatpush1.xpose.msra.mxu0 0.0
    %734 = vmatprep.subr.mxu0 0.0
    %735 = vmatpush1.xpose.msra.mxu0 0.0
    %736 = vmatprep.subr.mxu0 0.0
    %737 = vmatpush1.xpose.msra.mxu0 0.0
    %738 = vmatprep.subr.mxu0 0.0
    %739 = vmatpush1.xpose.msra.mxu0 0.0
    %740 = vmatprep.subr.mxu0 0.0
    %741 = vmatpush1.xpose.msra.mxu0 0.0
    %742 = vmatprep.subr.mxu0 0.0
    %743 = vmatpush1.xpose.msra.mxu0 0.0
    %744 = vmatprep.subr.mxu0 0.0
    %745 = vmatpush1.xpose.msra.mxu0 0.0
    %746 = vmatprep.subr.mxu0 0.0
    %747 = vmatpush1.xpose.msra.mxu0 0.0
    %748 = vmatprep.subr.mxu0 0.0
    %749 = vmatpush1.xpose.msra.mxu0 0.0
    %750 = vmatprep.subr.mxu0 0.0
    %751 = vmatpush1.xpose.msra.mxu0 0.0
    %752 = vmatprep.subr.mxu0 0.0
    %753 = vmatpush1.xpose.msra.mxu0 0.0
    %754 = vmatprep.subr.mxu0 0.0
    %755 = vmatpush1.xpose.msra.mxu0 0.0
    %756 = vmatprep.subr.mxu0 0.0
    %757 = vmatpush1.xpose.msra.mxu0 0.0
    %758 = vmatprep.subr.mxu0 0.0
    %759 = vmatpush1.xpose.msra.mxu0 0.0
    %760 = vmatprep.mubr.f32.mxu0 0.0
    %761 = vmatmul.mubr.f32.gmra.mrb[0].mxu0 %v692
    %v762 = vpop.f32.mrb[0].mxu0
    %v763 = vadd.f32 0.0, %v762
    %v764 = vpop.f32.mrb[0].mxu0
    %765 = vdwg.mxu0
    %766 = vrot.lane.b32.xlu0 %v232, 96
    %v767 = vpop.permute.xlu0 %766
    %v768 = vsel %vm235, %v232, 0
    %v770 = vsel %vm235, %v767, 0
    %772 = vmatprep.subr.mxu0 0.0
    %773 = vmatpush1.xpose.msra.mxu0 %v770
    %774 = vmatprep.subr.mxu0 0.0
    %775 = vmatpush1.xpose.msra.mxu0 0.0
    %776 = vmatprep.subr.mxu0 0.0
    %777 = vmatpush1.xpose.msra.mxu0 0.0
    %778 = vmatprep.subr.mxu0 0.0
    %779 = vmatpush1.xpose.msra.mxu0 0.0
    %780 = vmatprep.subr.mxu0 0.0
    %781 = vmatpush1.xpose.msra.mxu0 0.0
    %782 = vmatprep.subr.mxu0 0.0
    %783 = vmatpush1.xpose.msra.mxu0 0.0
    %784 = vmatprep.subr.mxu0 0.0
    %785 = vmatpush1.xpose.msra.mxu0 0.0
    %786 = vmatprep.subr.mxu0 0.0
    %787 = vmatpush1.xpose.msra.mxu0 0.0
    %788 = vmatprep.subr.mxu0 0.0
    %789 = vmatpush1.xpose.msra.mxu0 0.0
    %790 = vmatprep.subr.mxu0 0.0
    %791 = vmatpush1.xpose.msra.mxu0 0.0
    %792 = vmatprep.subr.mxu0 0.0
    %793 = vmatpush1.xpose.msra.mxu0 0.0
    %794 = vmatprep.subr.mxu0 0.0
    %795 = vmatpush1.xpose.msra.mxu0 0.0
    %796 = vmatprep.subr.mxu0 0.0
    %797 = vmatpush1.xpose.msra.mxu0 0.0
    %798 = vmatprep.subr.mxu0 0.0
    %799 = vmatpush1.xpose.msra.mxu0 0.0
    %800 = vmatprep.subr.mxu0 0.0
    %801 = vmatpush1.xpose.msra.mxu0 0.0
    %802 = vmatprep.subr.mxu0 0.0
    %803 = vmatpush1.xpose.msra.mxu0 0.0
    %804 = vmatprep.subr.mxu0 0.0
    %805 = vmatpush1.xpose.msra.mxu0 0.0
    %806 = vmatprep.subr.mxu0 0.0
    %807 = vmatpush1.xpose.msra.mxu0 0.0
    %808 = vmatprep.subr.mxu0 0.0
    %809 = vmatpush1.xpose.msra.mxu0 0.0
    %810 = vmatprep.subr.mxu0 0.0
    %811 = vmatpush1.xpose.msra.mxu0 0.0
    %812 = vmatprep.subr.mxu0 0.0
    %813 = vmatpush1.xpose.msra.mxu0 0.0
    %814 = vmatprep.subr.mxu0 0.0
    %815 = vmatpush1.xpose.msra.mxu0 0.0
    %816 = vmatprep.subr.mxu0 0.0
    %817 = vmatpush1.xpose.msra.mxu0 0.0
    %818 = vmatprep.subr.mxu0 0.0
    %819 = vmatpush1.xpose.msra.mxu0 0.0
    %820 = vmatprep.subr.mxu0 0.0
    %821 = vmatpush1.xpose.msra.mxu0 0.0
    %822 = vmatprep.subr.mxu0 0.0
    %823 = vmatpush1.xpose.msra.mxu0 0.0
    %824 = vmatprep.subr.mxu0 0.0
    %825 = vmatpush1.xpose.msra.mxu0 0.0
    %826 = vmatprep.subr.mxu0 0.0
    %827 = vmatpush1.xpose.msra.mxu0 0.0
    %828 = vmatprep.subr.mxu0 0.0
    %829 = vmatpush1.xpose.msra.mxu0 0.0
    %830 = vmatprep.subr.mxu0 0.0
    %831 = vmatpush1.xpose.msra.mxu0 0.0
    %832 = vmatprep.subr.mxu0 0.0
    %833 = vmatpush1.xpose.msra.mxu0 0.0
    %834 = vmatprep.subr.mxu0 0.0
    %835 = vmatpush1.xpose.msra.mxu0 0.0
    %836 = vmatprep.mubr.f32.mxu0 0.0
    %837 = vmatmul.mubr.f32.gmra.mrb[0].mxu0 %v768
    %v838 = vpop.f32.mrb[0].mxu0
    %v839 = vadd.f32 0.0, %v838
    %v840 = vpop.f32.mrb[0].mxu0
    %841 = vdwg.mxu0
    %v842 = vsel %vm235, %v307, -inf
    %843 = vmax.xlane.f32.xlu0 %v842
    %v844 = vpop.xlane.xlu0 %843
    %v845 = vsel %vm235, %v383, -inf
    %846 = vmax.xlane.f32.xlu0 %v845
    %v847 = vpop.xlane.xlu0 %846
    %v848 = vsel %vm235, %v459, -inf
    %849 = vmax.xlane.f32.xlu0 %v848
    %v850 = vpop.xlane.xlu0 %849
    %v851 = vsel %vm235, %v535, -inf
    %852 = vmax.xlane.f32.xlu0 %v851
    %v853 = vpop.xlane.xlu0 %852
    %v854 = vsel %vm235, %v611, -inf
    %855 = vmax.xlane.f32.xlu0 %v854
    %v856 = vpop.xlane.xlu0 %855
    %v857 = vsel %vm235, %v687, -inf
    %858 = vmax.xlane.f32.xlu0 %v857
    %v859 = vpop.xlane.xlu0 %858
    %v860 = vsel %vm235, %v763, -inf
    %861 = vmax.xlane.f32.xlu0 %v860
    %v862 = vpop.xlane.xlu0 %861
    %v863 = vsel %vm235, %v839, -inf
    %864 = vmax.xlane.f32.xlu0 %v863
    %v865 = vpop.xlane.xlu0 %864
    %v866 = vsub.f32 %v307, %v844
    %v867 = vsub.f32 %v383, %v847
    %v868 = vsub.f32 %v459, %v850
    %v869 = vsub.f32 %v535, %v853
    %v870 = vsub.f32 %v611, %v856
    %v871 = vsub.f32 %v687, %v859
    %v872 = vsub.f32 %v763, %v862
    %v873 = vsub.f32 %v839, %v865
    %v874 = vmul.f32 %v866, 1.442695
    %v875 = vpow.pop %v874
    %v876 = vmul.f32 %v867, 1.442695
    %v877 = vpow.pop %v876
    %v878 = vmul.f32 %v868, 1.442695
    %v879 = vpow.pop %v878
    %v880 = vmul.f32 %v869, 1.442695
    %v881 = vpow.pop %v880
    %v882 = vmul.f32 %v870, 1.442695
    %v883 = vpow.pop %v882
    %v884 = vmul.f32 %v871, 1.442695
    %v885 = vpow.pop %v884
    %v886 = vmul.f32 %v872, 1.442695
    %v887 = vpow.pop %v886
    %v888 = vmul.f32 %v873, 1.442695
    %v889 = vpow.pop %v888
    %v890 = vsel %vm235, %v875, 0.0
    %891 = vadd.xlane.f32.xlu0 %v890
    %v892 = vpop.xlane.xlu0 %891
    %v893 = vsel %vm235, %v877, 0.0
    %894 = vadd.xlane.f32.xlu0 %v893
    %v895 = vpop.xlane.xlu0 %894
    %v896 = vsel %vm235, %v879, 0.0
    %897 = vadd.xlane.f32.xlu0 %v896
    %v898 = vpop.xlane.xlu0 %897
    %v899 = vsel %vm235, %v881, 0.0
    %900 = vadd.xlane.f32.xlu0 %v899
    %v901 = vpop.xlane.xlu0 %900
    %v902 = vsel %vm235, %v883, 0.0
    %903 = vadd.xlane.f32.xlu0 %v902
    %v904 = vpop.xlane.xlu0 %903
    %v905 = vsel %vm235, %v885, 0.0
    %906 = vadd.xlane.f32.xlu0 %v905
    %v907 = vpop.xlane.xlu0 %906
    %v908 = vsel %vm235, %v887, 0.0
    %909 = vadd.xlane.f32.xlu0 %v908
    %v910 = vpop.xlane.xlu0 %909
    %v911 = vsel %vm235, %v889, 0.0
    %912 = vadd.xlane.f32.xlu0 %v911
    %v913 = vpop.xlane.xlu0 %912
    %v914 = vrcp.pop %v892
    %v915 = vrcp.pop %v895
    %v916 = vrcp.pop %v898
    %v917 = vrcp.pop %v901
    %v918 = vrcp.pop %v904
    %v919 = vrcp.pop %v907
    %v920 = vrcp.pop %v910
    %v921 = vrcp.pop %v913
    %v922 = vmul.f32 %v875, %v914
    %v923 = vmul.f32 %v877, %v915
    %v924 = vmul.f32 %v879, %v916
    %v925 = vmul.f32 %v881, %v917
    %v926 = vmul.f32 %v883, %v918
    %v927 = vmul.f32 %v885, %v919
    %v928 = vmul.f32 %v887, %v920
    %v929 = vmul.f32 %v889, %v921
    %930 = vrot.lane.b32.xlu0 %v211, 64
    %v931 = vpop.permute.xlu0 %930
    %v934 = vsel %vm235, %v922, 0
    %936 = vmatprep.subr.mxu0 0.0
    %937 = vmatpush1.msra.mxu0 %v931
    %938 = vmatprep.subr.mxu0 0.0
    %939 = vmatpush1.msra.mxu0 0.0
    %940 = vmatprep.subr.mxu0 0.0
    %941 = vmatpush1.msra.mxu0 0.0
    %942 = vmatprep.subr.mxu0 0.0
    %943 = vmatpush1.msra.mxu0 0.0
    %944 = vmatprep.subr.mxu0 0.0
    %945 = vmatpush1.msra.mxu0 0.0
    %946 = vmatprep.subr.mxu0 0.0
    %947 = vmatpush1.msra.mxu0 0.0
    %948 = vmatprep.subr.mxu0 0.0
    %949 = vmatpush1.msra.mxu0 0.0
    %950 = vmatprep.subr.mxu0 0.0
    %951 = vmatpush1.msra.mxu0 0.0
    %952 = vmatprep.subr.mxu0 0.0
    %953 = vmatpush1.msra.mxu0 0.0
    %954 = vmatprep.subr.mxu0 0.0
    %955 = vmatpush1.msra.mxu0 0.0
    %956 = vmatprep.subr.mxu0 0.0
    %957 = vmatpush1.msra.mxu0 0.0
    %958 = vmatprep.subr.mxu0 0.0
    %959 = vmatpush1.msra.mxu0 0.0
    %960 = vmatprep.subr.mxu0 0.0
    %961 = vmatpush1.msra.mxu0 0.0
    %962 = vmatprep.subr.mxu0 0.0
    %963 = vmatpush1.msra.mxu0 0.0
    %964 = vmatprep.subr.mxu0 0.0
    %965 = vmatpush1.msra.mxu0 0.0
    %966 = vmatprep.subr.mxu0 0.0
    %967 = vmatpush1.msra.mxu0 0.0
    %968 = vmatprep.subr.mxu0 0.0
    %969 = vmatpush1.msra.mxu0 0.0
    %970 = vmatprep.subr.mxu0 0.0
    %971 = vmatpush1.msra.mxu0 0.0
    %972 = vmatprep.subr.mxu0 0.0
    %973 = vmatpush1.msra.mxu0 0.0
    %974 = vmatprep.subr.mxu0 0.0
    %975 = vmatpush1.msra.mxu0 0.0
    %976 = vmatprep.subr.mxu0 0.0
    %977 = vmatpush1.msra.mxu0 0.0
    %978 = vmatprep.subr.mxu0 0.0
    %979 = vmatpush1.msra.mxu0 0.0
    %980 = vmatprep.subr.mxu0 0.0
    %981 = vmatpush1.msra.mxu0 0.0
    %982 = vmatprep.subr.mxu0 0.0
    %983 = vmatpush1.msra.mxu0 0.0
    %984 = vmatprep.subr.mxu0 0.0
    %985 = vmatpush1.msra.mxu0 0.0
    %986 = vmatprep.subr.mxu0 0.0
    %987 = vmatpush1.msra.mxu0 0.0
    %988 = vmatprep.subr.mxu0 0.0
    %989 = vmatpush1.msra.mxu0 0.0
    %990 = vmatprep.subr.mxu0 0.0
    %991 = vmatpush1.msra.mxu0 0.0
    %992 = vmatprep.subr.mxu0 0.0
    %993 = vmatpush1.msra.mxu0 0.0
    %994 = vmatprep.subr.mxu0 0.0
    %995 = vmatpush1.msra.mxu0 0.0
    %996 = vmatprep.subr.mxu0 0.0
    %997 = vmatpush1.msra.mxu0 0.0
    %998 = vmatprep.subr.mxu0 0.0
    %999 = vmatpush1.msra.mxu0 0.0
    %1000 = vmatprep.mubr.f32.mxu0 0.0
    %1001 = vmatmul.mubr.f32.gmra.mrb[0].mxu0 %v934
    %v1002 = vpop.f32.mrb[0].mxu0
    %v1003 = vadd.f32 0.0, %v1002
    %v1004 = vpop.f32.mrb[0].mxu0
    %1005 = vdwg.mxu0
    %1006 = vrot.lane.b32.xlu0 %v216, 64
    %v1007 = vpop.permute.xlu0 %1006
    %v1010 = vsel %vm235, %v923, 0
    %1012 = vmatprep.subr.mxu0 0.0
    %1013 = vmatpush1.msra.mxu0 %v1007
    %1014 = vmatprep.subr.mxu0 0.0
    %1015 = vmatpush1.msra.mxu0 0.0
    %1016 = vmatprep.subr.mxu0 0.0
    %1017 = vmatpush1.msra.mxu0 0.0
    %1018 = vmatprep.subr.mxu0 0.0
    %1019 = vmatpush1.msra.mxu0 0.0
    %1020 = vmatprep.subr.mxu0 0.0
    %1021 = vmatpush1.msra.mxu0 0.0
    %1022 = vmatprep.subr.mxu0 0.0
    %1023 = vmatpush1.msra.mxu0 0.0
    %1024 = vmatprep.subr.mxu0 0.0
    %1025 = vmatpush1.msra.mxu0 0.0
    %1026 = vmatprep.subr.mxu0 0.0
    %1027 = vmatpush1.msra.mxu0 0.0
    %1028 = vmatprep.subr.mxu0 0.0
    %1029 = vmatpush1.msra.mxu0 0.0
    %1030 = vmatprep.subr.mxu0 0.0
    %1031 = vmatpush1.msra.mxu0 0.0
    %1032 = vmatprep.subr.mxu0 0.0
    %1033 = vmatpush1.msra.mxu0 0.0
    %1034 = vmatprep.subr.mxu0 0.0
    %1035 = vmatpush1.msra.mxu0 0.0
    %1036 = vmatprep.subr.mxu0 0.0
    %1037 = vmatpush1.msra.mxu0 0.0
    %1038 = vmatprep.subr.mxu0 0.0
    %1039 = vmatpush1.msra.mxu0 0.0
    %1040 = vmatprep.subr.mxu0 0.0
    %1041 = vmatpush1.msra.mxu0 0.0
    %1042 = vmatprep.subr.mxu0 0.0
    %1043 = vmatpush1.msra.mxu0 0.0
    %1044 = vmatprep.subr.mxu0 0.0
    %1045 = vmatpush1.msra.mxu0 0.0
    %1046 = vmatprep.subr.mxu0 0.0
    %1047 = vmatpush1.msra.mxu0 0.0
    %1048 = vmatprep.subr.mxu0 0.0
    %1049 = vmatpush1.msra.mxu0 0.0
    %1050 = vmatprep.subr.mxu0 0.0
    %1051 = vmatpush1.msra.mxu0 0.0
    %1052 = vmatprep.subr.mxu0 0.0
    %1053 = vmatpush1.msra.mxu0 0.0
    %1054 = vmatprep.subr.mxu0 0.0
    %1055 = vmatpush1.msra.mxu0 0.0
    %1056 = vmatprep.subr.mxu0 0.0
    %1057 = vmatpush1.msra.mxu0 0.0
    %1058 = vmatprep.subr.mxu0 0.0
    %1059 = vmatpush1.msra.mxu0 0.0
    %1060 = vmatprep.subr.mxu0 0.0
    %1061 = vmatpush1.msra.mxu0 0.0
    %1062 = vmatprep.subr.mxu0 0.0
    %1063 = vmatpush1.msra.mxu0 0.0
    %1064 = vmatprep.subr.mxu0 0.0
    %1065 = vmatpush1.msra.mxu0 0.0
    %1066 = vmatprep.subr.mxu0 0.0
    %1067 = vmatpush1.msra.mxu0 0.0
    %1068 = vmatprep.subr.mxu0 0.0
    %1069 = vmatpush1.msra.mxu0 0.0
    %1070 = vmatprep.subr.mxu0 0.0
    %1071 = vmatpush1.msra.mxu0 0.0
    %1072 = vmatprep.subr.mxu0 0.0
    %1073 = vmatpush1.msra.mxu0 0.0
    %1074 = vmatprep.subr.mxu0 0.0
    %1075 = vmatpush1.msra.mxu0 0.0
    %1076 = vmatprep.mubr.f32.mxu0 0.0
    %1077 = vmatmul.mubr.f32.gmra.mrb[0].mxu0 %v1010
    %v1078 = vpop.f32.mrb[0].mxu0
    %v1079 = vadd.f32 0.0, %v1078
    %v1080 = vpop.f32.mrb[0].mxu0
    %1081 = vdwg.mxu0
    %1082 = vrot.lane.b32.xlu0 %v222, 64
    %v1083 = vpop.permute.xlu0 %1082
    %v1086 = vsel %vm235, %v924, 0
    %1088 = vmatprep.subr.mxu0 0.0
    %1089 = vmatpush1.msra.mxu0 %v1083
    %1090 = vmatprep.subr.mxu0 0.0
    %1091 = vmatpush1.msra.mxu0 0.0
    %1092 = vmatprep.subr.mxu0 0.0
    %1093 = vmatpush1.msra.mxu0 0.0
    %1094 = vmatprep.subr.mxu0 0.0
    %1095 = vmatpush1.msra.mxu0 0.0
    %1096 = vmatprep.subr.mxu0 0.0
    %1097 = vmatpush1.msra.mxu0 0.0
    %1098 = vmatprep.subr.mxu0 0.0
    %1099 = vmatpush1.msra.mxu0 0.0
    %1100 = vmatprep.subr.mxu0 0.0
    %1101 = vmatpush1.msra.mxu0 0.0
    %1102 = vmatprep.subr.mxu0 0.0
    %1103 = vmatpush1.msra.mxu0 0.0
    %1104 = vmatprep.subr.mxu0 0.0
    %1105 = vmatpush1.msra.mxu0 0.0
    %1106 = vmatprep.subr.mxu0 0.0
    %1107 = vmatpush1.msra.mxu0 0.0
    %1108 = vmatprep.subr.mxu0 0.0
    %1109 = vmatpush1.msra.mxu0 0.0
    %1110 = vmatprep.subr.mxu0 0.0
    %1111 = vmatpush1.msra.mxu0 0.0
    %1112 = vmatprep.subr.mxu0 0.0
    %1113 = vmatpush1.msra.mxu0 0.0
    %1114 = vmatprep.subr.mxu0 0.0
    %1115 = vmatpush1.msra.mxu0 0.0
    %1116 = vmatprep.subr.mxu0 0.0
    %1117 = vmatpush1.msra.mxu0 0.0
    %1118 = vmatprep.subr.mxu0 0.0
    %1119 = vmatpush1.msra.mxu0 0.0
    %1120 = vmatprep.subr.mxu0 0.0
    %1121 = vmatpush1.msra.mxu0 0.0
    %1122 = vmatprep.subr.mxu0 0.0
    %1123 = vmatpush1.msra.mxu0 0.0
    %1124 = vmatprep.subr.mxu0 0.0
    %1125 = vmatpush1.msra.mxu0 0.0
    %1126 = vmatprep.subr.mxu0 0.0
    %1127 = vmatpush1.msra.mxu0 0.0
    %1128 = vmatprep.subr.mxu0 0.0
    %1129 = vmatpush1.msra.mxu0 0.0
    %1130 = vmatprep.subr.mxu0 0.0
    %1131 = vmatpush1.msra.mxu0 0.0
    %1132 = vmatprep.subr.mxu0 0.0
    %1133 = vmatpush1.msra.mxu0 0.0
    %1134 = vmatprep.subr.mxu0 0.0
    %1135 = vmatpush1.msra.mxu0 0.0
    %1136 = vmatprep.subr.mxu0 0.0
    %1137 = vmatpush1.msra.mxu0 0.0
    %1138 = vmatprep.subr.mxu0 0.0
    %1139 = vmatpush1.msra.mxu0 0.0
    %1140 = vmatprep.subr.mxu0 0.0
    %1141 = vmatpush1.msra.mxu0 0.0
    %1142 = vmatprep.subr.mxu0 0.0
    %1143 = vmatpush1.msra.mxu0 0.0
    %1144 = vmatprep.subr.mxu0 0.0
    %1145 = vmatpush1.msra.mxu0 0.0
    %1146 = vmatprep.subr.mxu0 0.0
    %1147 = vmatpush1.msra.mxu0 0.0
    %1148 = vmatprep.subr.mxu0 0.0
    %1149 = vmatpush1.msra.mxu0 0.0
    %1150 = vmatprep.subr.mxu0 0.0
    %1151 = vmatpush1.msra.mxu0 0.0
    %1152 = vmatprep.mubr.f32.mxu0 0.0
    %1153 = vmatmul.mubr.f32.gmra.mrb[0].mxu0 %v1086
    %v1154 = vpop.f32.mrb[0].mxu0
    %v1155 = vadd.f32 0.0, %v1154
    %v1156 = vpop.f32.mrb[0].mxu0
    %1157 = vdwg.mxu0
    %1158 = vrot.lane.b32.xlu0 %v224, 64
    %v1159 = vpop.permute.xlu0 %1158
    %v1162 = vsel %vm235, %v925, 0
    %1164 = vmatprep.subr.mxu0 0.0
    %1165 = vmatpush1.msra.mxu0 %v1159
    %1166 = vmatprep.subr.mxu0 0.0
    %1167 = vmatpush1.msra.mxu0 0.0
    %1168 = vmatprep.subr.mxu0 0.0
    %1169 = vmatpush1.msra.mxu0 0.0
    %1170 = vmatprep.subr.mxu0 0.0
    %1171 = vmatpush1.msra.mxu0 0.0
    %1172 = vmatprep.subr.mxu0 0.0
    %1173 = vmatpush1.msra.mxu0 0.0
    %1174 = vmatprep.subr.mxu0 0.0
    %1175 = vmatpush1.msra.mxu0 0.0
    %1176 = vmatprep.subr.mxu0 0.0
    %1177 = vmatpush1.msra.mxu0 0.0
    %1178 = vmatprep.subr.mxu0 0.0
    %1179 = vmatpush1.msra.mxu0 0.0
    %1180 = vmatprep.subr.mxu0 0.0
    %1181 = vmatpush1.msra.mxu0 0.0
    %1182 = vmatprep.subr.mxu0 0.0
    %1183 = vmatpush1.msra.mxu0 0.0
    %1184 = vmatprep.subr.mxu0 0.0
    %1185 = vmatpush1.msra.mxu0 0.0
    %1186 = vmatprep.subr.mxu0 0.0
    %1187 = vmatpush1.msra.mxu0 0.0
    %1188 = vmatprep.subr.mxu0 0.0
    %1189 = vmatpush1.msra.mxu0 0.0
    %1190 = vmatprep.subr.mxu0 0.0
    %1191 = vmatpush1.msra.mxu0 0.0
    %1192 = vmatprep.subr.mxu0 0.0
    %1193 = vmatpush1.msra.mxu0 0.0
    %1194 = vmatprep.subr.mxu0 0.0
    %1195 = vmatpush1.msra.mxu0 0.0
    %1196 = vmatprep.subr.mxu0 0.0
    %1197 = vmatpush1.msra.mxu0 0.0
    %1198 = vmatprep.subr.mxu0 0.0
    %1199 = vmatpush1.msra.mxu0 0.0
    %1200 = vmatprep.subr.mxu0 0.0
    %1201 = vmatpush1.msra.mxu0 0.0
    %1202 = vmatprep.subr.mxu0 0.0
    %1203 = vmatpush1.msra.mxu0 0.0
    %1204 = vmatprep.subr.mxu0 0.0
    %1205 = vmatpush1.msra.mxu0 0.0
    %1206 = vmatprep.subr.mxu0 0.0
    %1207 = vmatpush1.msra.mxu0 0.0
    %1208 = vmatprep.subr.mxu0 0.0
    %1209 = vmatpush1.msra.mxu0 0.0
    %1210 = vmatprep.subr.mxu0 0.0
    %1211 = vmatpush1.msra.mxu0 0.0
    %1212 = vmatprep.subr.mxu0 0.0
    %1213 = vmatpush1.msra.mxu0 0.0
    %1214 = vmatprep.subr.mxu0 0.0
    %1215 = vmatpush1.msra.mxu0 0.0
    %1216 = vmatprep.subr.mxu0 0.0
    %1217 = vmatpush1.msra.mxu0 0.0
    %1218 = vmatprep.subr.mxu0 0.0
    %1219 = vmatpush1.msra.mxu0 0.0
    %1220 = vmatprep.subr.mxu0 0.0
    %1221 = vmatpush1.msra.mxu0 0.0
    %1222 = vmatprep.subr.mxu0 0.0
    %1223 = vmatpush1.msra.mxu0 0.0
    %1224 = vmatprep.subr.mxu0 0.0
    %1225 = vmatpush1.msra.mxu0 0.0
    %1226 = vmatprep.subr.mxu0 0.0
    %1227 = vmatpush1.msra.mxu0 0.0
    %1228 = vmatprep.mubr.f32.mxu0 0.0
    %1229 = vmatmul.mubr.f32.gmra.mrb[0].mxu0 %v1162
    %v1230 = vpop.f32.mrb[0].mxu0
    %v1231 = vadd.f32 0.0, %v1230
    %v1232 = vpop.f32.mrb[0].mxu0
    %1233 = vdwg.mxu0
    %1234 = vrot.lane.b32.xlu0 %v226, 64
    %v1235 = vpop.permute.xlu0 %1234
    %v1238 = vsel %vm235, %v926, 0
    %1240 = vmatprep.subr.mxu0 0.0
    %1241 = vmatpush1.msra.mxu0 %v1235
    %1242 = vmatprep.subr.mxu0 0.0
    %1243 = vmatpush1.msra.mxu0 0.0
    %1244 = vmatprep.subr.mxu0 0.0
    %1245 = vmatpush1.msra.mxu0 0.0
    %1246 = vmatprep.subr.mxu0 0.0
    %1247 = vmatpush1.msra.mxu0 0.0
    %1248 = vmatprep.subr.mxu0 0.0
    %1249 = vmatpush1.msra.mxu0 0.0
    %1250 = vmatprep.subr.mxu0 0.0
    %1251 = vmatpush1.msra.mxu0 0.0
    %1252 = vmatprep.subr.mxu0 0.0
    %1253 = vmatpush1.msra.mxu0 0.0
    %1254 = vmatprep.subr.mxu0 0.0
    %1255 = vmatpush1.msra.mxu0 0.0
    %1256 = vmatprep.subr.mxu0 0.0
    %1257 = vmatpush1.msra.mxu0 0.0
    %1258 = vmatprep.subr.mxu0 0.0
    %1259 = vmatpush1.msra.mxu0 0.0
    %1260 = vmatprep.subr.mxu0 0.0
    %1261 = vmatpush1.msra.mxu0 0.0
    %1262 = vmatprep.subr.mxu0 0.0
    %1263 = vmatpush1.msra.mxu0 0.0
    %1264 = vmatprep.subr.mxu0 0.0
    %1265 = vmatpush1.msra.mxu0 0.0
    %1266 = vmatprep.subr.mxu0 0.0
    %1267 = vmatpush1.msra.mxu0 0.0
    %1268 = vmatprep.subr.mxu0 0.0
    %1269 = vmatpush1.msra.mxu0 0.0
    %1270 = vmatprep.subr.mxu0 0.0
    %1271 = vmatpush1.msra.mxu0 0.0
    %1272 = vmatprep.subr.mxu0 0.0
    %1273 = vmatpush1.msra.mxu0 0.0
    %1274 = vmatprep.subr.mxu0 0.0
    %1275 = vmatpush1.msra.mxu0 0.0
    %1276 = vmatprep.subr.mxu0 0.0
    %1277 = vmatpush1.msra.mxu0 0.0
    %1278 = vmatprep.subr.mxu0 0.0
    %1279 = vmatpush1.msra.mxu0 0.0
    %1280 = vmatprep.subr.mxu0 0.0
    %1281 = vmatpush1.msra.mxu0 0.0
    %1282 = vmatprep.subr.mxu0 0.0
    %1283 = vmatpush1.msra.mxu0 0.0
    %1284 = vmatprep.subr.mxu0 0.0
    %1285 = vmatpush1.msra.mxu0 0.0
    %1286 = vmatprep.subr.mxu0 0.0
    %1287 = vmatpush1.msra.mxu0 0.0
    %1288 = vmatprep.subr.mxu0 0.0
    %1289 = vmatpush1.msra.mxu0 0.0
    %1290 = vmatprep.subr.mxu0 0.0
    %1291 = vmatpush1.msra.mxu0 0.0
    %1292 = vmatprep.subr.mxu0 0.0
    %1293 = vmatpush1.msra.mxu0 0.0
    %1294 = vmatprep.subr.mxu0 0.0
    %1295 = vmatpush1.msra.mxu0 0.0
    %1296 = vmatprep.subr.mxu0 0.0
    %1297 = vmatpush1.msra.mxu0 0.0
    %1298 = vmatprep.subr.mxu0 0.0
    %1299 = vmatpush1.msra.mxu0 0.0
    %1300 = vmatprep.subr.mxu0 0.0
    %1301 = vmatpush1.msra.mxu0 0.0
    %1302 = vmatprep.subr.mxu0 0.0
    %1303 = vmatpush1.msra.mxu0 0.0
    %1304 = vmatprep.mubr.f32.mxu0 0.0
    %1305 = vmatmul.mubr.f32.gmra.mrb[0].mxu0 %v1238
    %v1306 = vpop.f32.mrb[0].mxu0
    %v1307 = vadd.f32 0.0, %v1306
    %v1308 = vpop.f32.mrb[0].mxu0
    %1309 = vdwg.mxu0
    %1310 = vrot.lane.b32.xlu0 %v228, 64
    %v1311 = vpop.permute.xlu0 %1310
    %v1314 = vsel %vm235, %v927, 0
    %1316 = vmatprep.subr.mxu0 0.0
    %1317 = vmatpush1.msra.mxu0 %v1311
    %1318 = vmatprep.subr.mxu0 0.0
    %1319 = vmatpush1.msra.mxu0 0.0
    %1320 = vmatprep.subr.mxu0 0.0
    %1321 = vmatpush1.msra.mxu0 0.0
    %1322 = vmatprep.subr.mxu0 0.0
    %1323 = vmatpush1.msra.mxu0 0.0
    %1324 = vmatprep.subr.mxu0 0.0
    %1325 = vmatpush1.msra.mxu0 0.0
    %1326 = vmatprep.subr.mxu0 0.0
    %1327 = vmatpush1.msra.mxu0 0.0
    %1328 = vmatprep.subr.mxu0 0.0
    %1329 = vmatpush1.msra.mxu0 0.0
    %1330 = vmatprep.subr.mxu0 0.0
    %1331 = vmatpush1.msra.mxu0 0.0
    %1332 = vmatprep.subr.mxu0 0.0
    %1333 = vmatpush1.msra.mxu0 0.0
    %1334 = vmatprep.subr.mxu0 0.0
    %1335 = vmatpush1.msra.mxu0 0.0
    %1336 = vmatprep.subr.mxu0 0.0
    %1337 = vmatpush1.msra.mxu0 0.0
    %1338 = vmatprep.subr.mxu0 0.0
    %1339 = vmatpush1.msra.mxu0 0.0
    %1340 = vmatprep.subr.mxu0 0.0
    %1341 = vmatpush1.msra.mxu0 0.0
    %1342 = vmatprep.subr.mxu0 0.0
    %1343 = vmatpush1.msra.mxu0 0.0
    %1344 = vmatprep.subr.mxu0 0.0
    %1345 = vmatpush1.msra.mxu0 0.0
    %1346 = vmatprep.subr.mxu0 0.0
    %1347 = vmatpush1.msra.mxu0 0.0
    %1348 = vmatprep.subr.mxu0 0.0
    %1349 = vmatpush1.msra.mxu0 0.0
    %1350 = vmatprep.subr.mxu0 0.0
    %1351 = vmatpush1.msra.mxu0 0.0
    %1352 = vmatprep.subr.mxu0 0.0
    %1353 = vmatpush1.msra.mxu0 0.0
    %1354 = vmatprep.subr.mxu0 0.0
    %1355 = vmatpush1.msra.mxu0 0.0
    %1356 = vmatprep.subr.mxu0 0.0
    %1357 = vmatpush1.msra.mxu0 0.0
    %1358 = vmatprep.subr.mxu0 0.0
    %1359 = vmatpush1.msra.mxu0 0.0
    %1360 = vmatprep.subr.mxu0 0.0
    %1361 = vmatpush1.msra.mxu0 0.0
    %1362 = vmatprep.subr.mxu0 0.0
    %1363 = vmatpush1.msra.mxu0 0.0
    %1364 = vmatprep.subr.mxu0 0.0
    %1365 = vmatpush1.msra.mxu0 0.0
    %1366 = vmatprep.subr.mxu0 0.0
    %1367 = vmatpush1.msra.mxu0 0.0
    %1368 = vmatprep.subr.mxu0 0.0
    %1369 = vmatpush1.msra.mxu0 0.0
    %1370 = vmatprep.subr.mxu0 0.0
    %1371 = vmatpush1.msra.mxu0 0.0
    %1372 = vmatprep.subr.mxu0 0.0
    %1373 = vmatpush1.msra.mxu0 0.0
    %1374 = vmatprep.subr.mxu0 0.0
    %1375 = vmatpush1.msra.mxu0 0.0
    %1376 = vmatprep.subr.mxu0 0.0
    %1377 = vmatpush1.msra.mxu0 0.0
    %1378 = vmatprep.subr.mxu0 0.0
    %1379 = vmatpush1.msra.mxu0 0.0
    %1380 = vmatprep.mubr.f32.mxu0 0.0
    %1381 = vmatmul.mubr.f32.gmra.mrb[0].mxu0 %v1314
    %v1382 = vpop.f32.mrb[0].mxu0
    %v1383 = vadd.f32 0.0, %v1382
    %v1384 = vpop.f32.mrb[0].mxu0
    %1385 = vdwg.mxu0
    %1386 = vrot.lane.b32.xlu0 %v230, 64
    %v1387 = vpop.permute.xlu0 %1386
    %v1390 = vsel %vm235, %v928, 0
    %1392 = vmatprep.subr.mxu0 0.0
    %1393 = vmatpush1.msra.mxu0 %v1387
    %1394 = vmatprep.subr.mxu0 0.0
    %1395 = vmatpush1.msra.mxu0 0.0
    %1396 = vmatprep.subr.mxu0 0.0
    %1397 = vmatpush1.msra.mxu0 0.0
    %1398 = vmatprep.subr.mxu0 0.0
    %1399 = vmatpush1.msra.mxu0 0.0
    %1400 = vmatprep.subr.mxu0 0.0
    %1401 = vmatpush1.msra.mxu0 0.0
    %1402 = vmatprep.subr.mxu0 0.0
    %1403 = vmatpush1.msra.mxu0 0.0
    %1404 = vmatprep.subr.mxu0 0.0
    %1405 = vmatpush1.msra.mxu0 0.0
    %1406 = vmatprep.subr.mxu0 0.0
    %1407 = vmatpush1.msra.mxu0 0.0
    %1408 = vmatprep.subr.mxu0 0.0
    %1409 = vmatpush1.msra.mxu0 0.0
    %1410 = vmatprep.subr.mxu0 0.0
    %1411 = vmatpush1.msra.mxu0 0.0
    %1412 = vmatprep.subr.mxu0 0.0
    %1413 = vmatpush1.msra.mxu0 0.0
    %1414 = vmatprep.subr.mxu0 0.0
    %1415 = vmatpush1.msra.mxu0 0.0
    %1416 = vmatprep.subr.mxu0 0.0
    %1417 = vmatpush1.msra.mxu0 0.0
    %1418 = vmatprep.subr.mxu0 0.0
    %1419 = vmatpush1.msra.mxu0 0.0
    %1420 = vmatprep.subr.mxu0 0.0
    %1421 = vmatpush1.msra.mxu0 0.0
    %1422 = vmatprep.subr.mxu0 0.0
    %1423 = vmatpush1.msra.mxu0 0.0
    %1424 = vmatprep.subr.mxu0 0.0
    %1425 = vmatpush1.msra.mxu0 0.0
    %1426 = vmatprep.subr.mxu0 0.0
    %1427 = vmatpush1.msra.mxu0 0.0
    %1428 = vmatprep.subr.mxu0 0.0
    %1429 = vmatpush1.msra.mxu0 0.0
    %1430 = vmatprep.subr.mxu0 0.0
    %1431 = vmatpush1.msra.mxu0 0.0
    %1432 = vmatprep.subr.mxu0 0.0
    %1433 = vmatpush1.msra.mxu0 0.0
    %1434 = vmatprep.subr.mxu0 0.0
    %1435 = vmatpush1.msra.mxu0 0.0
    %1436 = vmatprep.subr.mxu0 0.0
    %1437 = vmatpush1.msra.mxu0 0.0
    %1438 = vmatprep.subr.mxu0 0.0
    %1439 = vmatpush1.msra.mxu0 0.0
    %1440 = vmatprep.subr.mxu0 0.0
    %1441 = vmatpush1.msra.mxu0 0.0
    %1442 = vmatprep.subr.mxu0 0.0
    %1443 = vmatpush1.msra.mxu0 0.0
    %1444 = vmatprep.subr.mxu0 0.0
    %1445 = vmatpush1.msra.mxu0 0.0
    %1446 = vmatprep.subr.mxu0 0.0
    %1447 = vmatpush1.msra.mxu0 0.0
    %1448 = vmatprep.subr.mxu0 0.0
    %1449 = vmatpush1.msra.mxu0 0.0
    %1450 = vmatprep.subr.mxu0 0.0
    %1451 = vmatpush1.msra.mxu0 0.0
    %1452 = vmatprep.subr.mxu0 0.0
    %1453 = vmatpush1.msra.mxu0 0.0
    %1454 = vmatprep.subr.mxu0 0.0
    %1455 = vmatpush1.msra.mxu0 0.0
    %1456 = vmatprep.mubr.f32.mxu0 0.0
    %1457 = vmatmul.mubr.f32.gmra.mrb[0].mxu0 %v1390
    %v1458 = vpop.f32.mrb[0].mxu0
    %v1459 = vadd.f32 0.0, %v1458
    %v1460 = vpop.f32.mrb[0].mxu0
    %1461 = vdwg.mxu0
    %1462 = vrot.lane.b32.xlu0 %v232, 64
    %v1463 = vpop.permute.xlu0 %1462
    %v1466 = vsel %vm235, %v929, 0
    %1468 = vmatprep.subr.mxu0 0.0
    %1469 = vmatpush1.msra.mxu0 %v1463
    %1470 = vmatprep.subr.mxu0 0.0
    %1471 = vmatpush1.msra.mxu0 0.0
    %1472 = vmatprep.subr.mxu0 0.0
    %1473 = vmatpush1.msra.mxu0 0.0
    %1474 = vmatprep.subr.mxu0 0.0
    %1475 = vmatpush1.msra.mxu0 0.0
    %1476 = vmatprep.subr.mxu0 0.0
    %1477 = vmatpush1.msra.mxu0 0.0
    %1478 = vmatprep.subr.mxu0 0.0
    %1479 = vmatpush1.msra.mxu0 0.0
    %1480 = vmatprep.subr.mxu0 0.0
    %1481 = vmatpush1.msra.mxu0 0.0
    %1482 = vmatprep.subr.mxu0 0.0
    %1483 = vmatpush1.msra.mxu0 0.0
    %1484 = vmatprep.subr.mxu0 0.0
    %1485 = vmatpush1.msra.mxu0 0.0
    %1486 = vmatprep.subr.mxu0 0.0
    %1487 = vmatpush1.msra.mxu0 0.0
    %1488 = vmatprep.subr.mxu0 0.0
    %1489 = vmatpush1.msra.mxu0 0.0
    %1490 = vmatprep.subr.mxu0 0.0
    %1491 = vmatpush1.msra.mxu0 0.0
    %1492 = vmatprep.subr.mxu0 0.0
    %1493 = vmatpush1.msra.mxu0 0.0
    %1494 = vmatprep.subr.mxu0 0.0
    %1495 = vmatpush1.msra.mxu0 0.0
    %1496 = vmatprep.subr.mxu0 0.0
    %1497 = vmatpush1.msra.mxu0 0.0
    %1498 = vmatprep.subr.mxu0 0.0
    %1499 = vmatpush1.msra.mxu0 0.0
    %1500 = vmatprep.subr.mxu0 0.0
    %1501 = vmatpush1.msra.mxu0 0.0
    %1502 = vmatprep.subr.mxu0 0.0
    %1503 = vmatpush1.msra.mxu0 0.0
    %1504 = vmatprep.subr.mxu0 0.0
    %1505 = vmatpush1.msra.mxu0 0.0
    %1506 = vmatprep.subr.mxu0 0.0
    %1507 = vmatpush1.msra.mxu0 0.0
    %1508 = vmatprep.subr.mxu0 0.0
    %1509 = vmatpush1.msra.mxu0 0.0
    %1510 = vmatprep.subr.mxu0 0.0
    %1511 = vmatpush1.msra.mxu0 0.0
    %1512 = vmatprep.subr.mxu0 0.0
    %1513 = vmatpush1.msra.mxu0 0.0
    %1514 = vmatprep.subr.mxu0 0.0
    %1515 = vmatpush1.msra.mxu0 0.0
    %1516 = vmatprep.subr.mxu0 0.0
    %1517 = vmatpush1.msra.mxu0 0.0
    %1518 = vmatprep.subr.mxu0 0.0
    %1519 = vmatpush1.msra.mxu0 0.0
    %1520 = vmatprep.subr.mxu0 0.0
    %1521 = vmatpush1.msra.mxu0 0.0
    %1522 = vmatprep.subr.mxu0 0.0
    %1523 = vmatpush1.msra.mxu0 0.0
    %1524 = vmatprep.subr.mxu0 0.0
    %1525 = vmatpush1.msra.mxu0 0.0
    %1526 = vmatprep.subr.mxu0 0.0
    %1527 = vmatpush1.msra.mxu0 0.0
    %1528 = vmatprep.subr.mxu0 0.0
    %1529 = vmatpush1.msra.mxu0 0.0
    %1530 = vmatprep.subr.mxu0 0.0
    %1531 = vmatpush1.msra.mxu0 0.0
    %1532 = vmatprep.mubr.f32.mxu0 0.0
    %1533 = vmatmul.mubr.f32.gmra.mrb[0].mxu0 %v1466
    %v1534 = vpop.f32.mrb[0].mxu0
    %v1535 = vadd.f32 0.0, %v1534
    %v1536 = vpop.f32.mrb[0].mxu0
    %1537 = vdwg.mxu0
    %1540 = vrot.lane.b32.xlu0 %v1155, 8
    %v1541 = vpop.permute.xlu0 %1540
    %1542 = vrot.lane.b32.xlu0 %v1231, 8
    %v1543 = vpop.permute.xlu0 %1542
    %1548 = vrot.lane.b32.xlu0 %v1307, 16
    %v1549 = vpop.permute.xlu0 %1548
    %1550 = vrot.lane.b32.xlu0 %v1383, 16
    %v1551 = vpop.permute.xlu0 %1550
    %1556 = vrot.lane.b32.xlu0 %v1459, 24
    %v1557 = vpop.permute.xlu0 %1556
    %1558 = vrot.lane.b32.xlu0 %v1535, 24
    %v1559 = vpop.permute.xlu0 %1558
    %v1562 = vsel %vm235, %v1003, %v1541
    %v1563 = vsel %vm235, %v1079, %v1543
    %vm1564 = vcmask 130048
    %v1565 = vsel %vm1564, %v1562, %v1549
    %v1566 = vsel %vm1564, %v1563, %v1551
    %vm1567 = vcmask 195584
    %v1568 = vsel %vm1567, %v1565, %v1557
    %v1569 = vsel %vm1567, %v1566, %v1559
    %v1570 = vlaneseq
    %v1571 = vshrl.u32 %v1570, 7
    %v1572 = vsub.s32 0, %v1571
    %v1573 = vrot.slane %v128, %v1572
    %v1575 = vsel %vm139, %v1568, 0
    %v1578 = vsel %vm139, %v1569, 0
    %1580 = vmatprep.subr.mxu0 0.0
    %1581 = vmatpush1.msra.mxu0 %v111
    %1582 = vmatprep.subr.mxu0 0.0
    %1583 = vmatpush1.msra.mxu0 %v112
    %1584 = vmatprep.subr.mxu0 0.0
    %1585 = vmatpush1.msra.mxu0 %v113
    %1586 = vmatprep.subr.mxu0 0.0
    %1587 = vmatpush1.msra.mxu0 %v114
    %1588 = vmatprep.subr.mxu0 0.0
    %1589 = vmatpush1.msra.mxu0 0.0
    %1590 = vmatprep.subr.mxu0 0.0
    %1591 = vmatpush1.msra.mxu0 0.0
    %1592 = vmatprep.subr.mxu0 0.0
    %1593 = vmatpush1.msra.mxu0 0.0
    %1594 = vmatprep.subr.mxu0 0.0
    %1595 = vmatpush1.msra.mxu0 0.0
    %1596 = vmatprep.subr.mxu0 0.0
    %1597 = vmatpush1.msra.mxu0 0.0
    %1598 = vmatprep.subr.mxu0 0.0
    %1599 = vmatpush1.msra.mxu0 0.0
    %1600 = vmatprep.subr.mxu0 0.0
    %1601 = vmatpush1.msra.mxu0 0.0
    %1602 = vmatprep.subr.mxu0 0.0
    %1603 = vmatpush1.msra.mxu0 0.0
    %1604 = vmatprep.subr.mxu0 0.0
    %1605 = vmatpush1.msra.mxu0 0.0
    %1606 = vmatprep.subr.mxu0 0.0
    %1607 = vmatpush1.msra.mxu0 0.0
    %1608 = vmatprep.subr.mxu0 0.0
    %1609 = vmatpush1.msra.mxu0 0.0
    %1610 = vmatprep.subr.mxu0 0.0
    %1611 = vmatpush1.msra.mxu0 0.0
    %1612 = vmatprep.subr.mxu0 0.0
    %1613 = vmatpush1.msra.mxu0 0.0
    %1614 = vmatprep.subr.mxu0 0.0
    %1615 = vmatpush1.msra.mxu0 0.0
    %1616 = vmatprep.subr.mxu0 0.0
    %1617 = vmatpush1.msra.mxu0 0.0
    %1618 = vmatprep.subr.mxu0 0.0
    %1619 = vmatpush1.msra.mxu0 0.0
    %1620 = vmatprep.subr.mxu0 0.0
    %1621 = vmatpush1.msra.mxu0 0.0
    %1622 = vmatprep.subr.mxu0 0.0
    %1623 = vmatpush1.msra.mxu0 0.0
    %1624 = vmatprep.subr.mxu0 0.0
    %1625 = vmatpush1.msra.mxu0 0.0
    %1626 = vmatprep.subr.mxu0 0.0
    %1627 = vmatpush1.msra.mxu0 0.0
    %1628 = vmatprep.subr.mxu0 0.0
    %1629 = vmatpush1.msra.mxu0 0.0
    %1630 = vmatprep.subr.mxu0 0.0
    %1631 = vmatpush1.msra.mxu0 0.0
    %1632 = vmatprep.subr.mxu0 0.0
    %1633 = vmatpush1.msra.mxu0 0.0
    %1634 = vmatprep.subr.mxu0 0.0
    %1635 = vmatpush1.msra.mxu0 0.0
    %1636 = vmatprep.subr.mxu0 0.0
    %1637 = vmatpush1.msra.mxu0 0.0
    %1638 = vmatprep.subr.mxu0 0.0
    %1639 = vmatpush1.msra.mxu0 0.0
    %1640 = vmatprep.subr.mxu0 0.0
    %1641 = vmatpush1.msra.mxu0 0.0
    %1642 = vmatprep.subr.mxu0 0.0
    %1643 = vmatpush1.msra.mxu0 0.0
    %1644 = vmatprep.mubr.f32.mxu0 0.0
    %1645 = vmatmul.mubr.f32.gmra.mrb[0].mxu0 %v1575
    %v1646 = vpop.f32.mrb[0].mxu0
    %v1647 = vadd.f32 %v1573, %v1646
    %v1648 = vpop.f32.mrb[0].mxu0
    %1649 = vmatprep.mubr.f32.mxu0 0.0
    %1650 = vmatmul.mubr.f32.gmra.mrb[0].mxu0 %v1578
    %v1651 = vpop.f32.mrb[0].mxu0
    %v1652 = vadd.f32 %v1573, %v1651
    %v1653 = vpop.f32.mrb[0].mxu0
    %1654 = vdwg.mxu0
    %v1655 = vadd.f32 %v90, %v1647
    %v1656 = vadd.f32 %v105, %v1652
    %v1657 = vsel %vm139, %v1655, 0.0
    %1658 = vadd.xlane.f32.xlu0 %v1657
    %v1659 = vpop.xlane.xlu0 %1658
    %v1660 = vsel %vm139, %v1656, 0.0
    %1661 = vadd.xlane.f32.xlu0 %v1660
    %v1662 = vpop.xlane.xlu0 %1661
    %v1663 = vrcp.pop 32.0
    %v1664 = vmul.f32 %v1659, %v1663
    %v1665 = vmul.f32 %v1662, %v1663
    %v1666 = vsub.f32 %v1655, %v1664
    %v1667 = vsub.f32 %v1656, %v1665
    %v1668 = vmul.f32 %v1666, %v1666
    %v1669 = vmul.f32 %v1667, %v1667
    %v1670 = vsel %vm139, %v1668, 0.0
    %1671 = vadd.xlane.f32.xlu0 %v1670
    %v1672 = vpop.xlane.xlu0 %1671
    %v1673 = vsel %vm139, %v1669, 0.0
    %1674 = vadd.xlane.f32.xlu0 %v1673
    %v1675 = vpop.xlane.xlu0 %1674
    %v1676 = vmul.f32 %v1672, %v1663
    %v1677 = vmul.f32 %v1675, %v1663
    %v1678 = vadd.f32 %v1676, 1e-05
    %v1679 = vadd.f32 %v1677, 1e-05
    %v1680 = vrsqrt.pop %v1678
    %v1681 = vrsqrt.pop %v1679
    %v1682 = vlaneseq
    %v1683 = vshrl.u32 %v1682, 7
    %v1684 = vsub.s32 0, %v1683
    %v1685 = vrot.slane %v131, %v1684
    %v1686 = vmul.f32 %v1680, %v1685
    %v1687 = vmul.f32 %v1681, %v1685
    %v1688 = vmul.f32 %v1666, %v1686
    %v1689 = vmul.f32 %v1667, %v1687
    %v1690 = vlaneseq
    %v1691 = vshrl.u32 %v1690, 7
    %v1692 = vsub.s32 0, %v1691
    %v1693 = vrot.slane %v132, %v1692
    %v1694 = vadd.f32 %v1688, %v1693
    %v1695 = vadd.f32 %v1689, %v1693
    %v1696 = vlaneseq
    %v1697 = vshrl.u32 %v1696, 7
    %v1698 = vsub.s32 0, %v1697
    %v1699 = vrot.slane %v129, %v1698
    %v1701 = vsel %vm139, %v1694, 0
    %v1704 = vsel %vm139, %v1695, 0
    %1706 = vmatprep.subr.mxu0 0.0
    %1707 = vmatpush1.msra.mxu0 %v115
    %1708 = vmatprep.subr.mxu0 0.0
    %1709 = vmatpush1.msra.mxu0 %v116
    %1710 = vmatprep.subr.mxu0 0.0
    %1711 = vmatpush1.msra.mxu0 %v117
    %1712 = vmatprep.subr.mxu0 0.0
    %1713 = vmatpush1.msra.mxu0 %v118
    %1714 = vmatprep.subr.mxu0 0.0
    %1715 = vmatpush1.msra.mxu0 0.0
    %1716 = vmatprep.subr.mxu0 0.0
    %1717 = vmatpush1.msra.mxu0 0.0
    %1718 = vmatprep.subr.mxu0 0.0
    %1719 = vmatpush1.msra.mxu0 0.0
    %1720 = vmatprep.subr.mxu0 0.0
    %1721 = vmatpush1.msra.mxu0 0.0
    %1722 = vmatprep.subr.mxu0 0.0
    %1723 = vmatpush1.msra.mxu0 0.0
    %1724 = vmatprep.subr.mxu0 0.0
    %1725 = vmatpush1.msra.mxu0 0.0
    %1726 = vmatprep.subr.mxu0 0.0
    %1727 = vmatpush1.msra.mxu0 0.0
    %1728 = vmatprep.subr.mxu0 0.0
    %1729 = vmatpush1.msra.mxu0 0.0
    %1730 = vmatprep.subr.mxu0 0.0
    %1731 = vmatpush1.msra.mxu0 0.0
    %1732 = vmatprep.subr.mxu0 0.0
    %1733 = vmatpush1.msra.mxu0 0.0
    %1734 = vmatprep.subr.mxu0 0.0
    %1735 = vmatpush1.msra.mxu0 0.0
    %1736 = vmatprep.subr.mxu0 0.0
    %1737 = vmatpush1.msra.mxu0 0.0
    %1738 = vmatprep.subr.mxu0 0.0
    %1739 = vmatpush1.msra.mxu0 0.0
    %1740 = vmatprep.subr.mxu0 0.0
    %1741 = vmatpush1.msra.mxu0 0.0
    %1742 = vmatprep.subr.mxu0 0.0
    %1743 = vmatpush1.msra.mxu0 0.0
    %1744 = vmatprep.subr.mxu0 0.0
    %1745 = vmatpush1.msra.mxu0 0.0
    %1746 = vmatprep.subr.mxu0 0.0
    %1747 = vmatpush1.msra.mxu0 0.0
    %1748 = vmatprep.subr.mxu0 0.0
    %1749 = vmatpush1.msra.mxu0 0.0
    %1750 = vmatprep.subr.mxu0 0.0
    %1751 = vmatpush1.msra.mxu0 0.0
    %1752 = vmatprep.subr.mxu0 0.0
    %1753 = vmatpush1.msra.mxu0 0.0
    %1754 = vmatprep.subr.mxu0 0.0
    %1755 = vmatpush1.msra.mxu0 0.0
    %1756 = vmatprep.subr.mxu0 0.0
    %1757 = vmatpush1.msra.mxu0 0.0
    %1758 = vmatprep.subr.mxu0 0.0
    %1759 = vmatpush1.msra.mxu0 0.0
    %1760 = vmatprep.subr.mxu0 0.0
    %1761 = vmatpush1.msra.mxu0 0.0
    %1762 = vmatprep.subr.mxu0 0.0
    %1763 = vmatpush1.msra.mxu0 0.0
    %1764 = vmatprep.subr.mxu0 0.0
    %1765 = vmatpush1.msra.mxu0 0.0
    %1766 = vmatprep.subr.mxu0 0.0
    %1767 = vmatpush1.msra.mxu0 0.0
    %1768 = vmatprep.subr.mxu0 0.0
    %1769 = vmatpush1.msra.mxu0 0.0
    %1770 = vmatprep.mubr.f32.mxu0 0.0
    %1771 = vmatmul.mubr.f32.gmra.mrb[0].mxu0 %v1701
    %v1772 = vpop.f32.mrb[0].mxu0
    %v1773 = vadd.f32 %v1699, %v1772
    %v1774 = vpop.f32.mrb[0].mxu0
    %1775 = vmatprep.mubr.f32.mxu0 0.0
    %1776 = vmatmul.mubr.f32.gmra.mrb[0].mxu0 %v1704
    %v1777 = vpop.f32.mrb[0].mxu0
    %v1778 = vadd.f32 %v1699, %v1777
    %v1779 = vpop.f32.mrb[0].mxu0
    %1780 = vdwg.mxu0
    %v1781 = vmax.f32 %v1773, 0.0
    %v1782 = vmax.f32 %v1778, 0.0
    %v1783 = vlaneseq
    %v1784 = vshrl.u32 %v1783, 7
    %v1785 = vsub.s32 0, %v1784
    %v1786 = vrot.slane %v130, %v1785
    %vm1787 = vcmask 523264
    %v1789 = vsel %vm1787, %v1781, 0
    %v1792 = vsel %vm1787, %v1782, 0
    %1794 = vmatprep.subr.mxu0 0.0
    %1795 = vmatpush1.msra.mxu0 %v119
    %1796 = vmatprep.subr.mxu0 0.0
    %1797 = vmatpush1.msra.mxu0 %v120
    %1798 = vmatprep.subr.mxu0 0.0
    %1799 = vmatpush1.msra.mxu0 %v121
    %1800 = vmatprep.subr.mxu0 0.0
    %1801 = vmatpush1.msra.mxu0 %v122
    %1802 = vmatprep.subr.mxu0 0.0
    %1803 = vmatpush1.msra.mxu0 %v123
    %1804 = vmatprep.subr.mxu0 0.0
    %1805 = vmatpush1.msra.mxu0 %v124
    %1806 = vmatprep.subr.mxu0 0.0
    %1807 = vmatpush1.msra.mxu0 %v125
    %1808 = vmatprep.subr.mxu0 0.0
    %1809 = vmatpush1.msra.mxu0 %v126
    %1810 = vmatprep.subr.mxu0 0.0
    %1811 = vmatpush1.msra.mxu0 0.0
    %1812 = vmatprep.subr.mxu0 0.0
    %1813 = vmatpush1.msra.mxu0 0.0
    %1814 = vmatprep.subr.mxu0 0.0
    %1815 = vmatpush1.msra.mxu0 0.0
    %1816 = vmatprep.subr.mxu0 0.0
    %1817 = vmatpush1.msra.mxu0 0.0
    %1818 = vmatprep.subr.mxu0 0.0
    %1819 = vmatpush1.msra.mxu0 0.0
    %1820 = vmatprep.subr.mxu0 0.0
    %1821 = vmatpush1.msra.mxu0 0.0
    %1822 = vmatprep.subr.mxu0 0.0
    %1823 = vmatpush1.msra.mxu0 0.0
    %1824 = vmatprep.subr.mxu0 0.0
    %1825 = vmatpush1.msra.mxu0 0.0
    %1826 = vmatprep.subr.mxu0 0.0
    %1827 = vmatpush1.msra.mxu0 0.0
    %1828 = vmatprep.subr.mxu0 0.0
    %1829 = vmatpush1.msra.mxu0 0.0
    %1830 = vmatprep.subr.mxu0 0.0
    %1831 = vmatpush1.msra.mxu0 0.0
    %1832 = vmatprep.subr.mxu0 0.0
    %1833 = vmatpush1.msra.mxu0 0.0
    %1834 = vmatprep.subr.mxu0 0.0
    %1835 = vmatpush1.msra.mxu0 0.0
    %1836 = vmatprep.subr.mxu0 0.0
    %1837 = vmatpush1.msra.mxu0 0.0
    %1838 = vmatprep.subr.mxu0 0.0
    %1839 = vmatpush1.msra.mxu0 0.0
    %1840 = vmatprep.subr.mxu0 0.0
    %1841 = vmatpush1.msra.mxu0 0.0
    %1842 = vmatprep.subr.mxu0 0.0
    %1843 = vmatpush1.msra.mxu0 0.0
    %1844 = vmatprep.subr.mxu0 0.0
    %1845 = vmatpush1.msra.mxu0 0.0
    %1846 = vmatprep.subr.mxu0 0.0
    %1847 = vmatpush1.msra.mxu0 0.0
    %1848 = vmatprep.subr.mxu0 0.0
    %1849 = vmatpush1.msra.mxu0 0.0
    %1850 = vmatprep.subr.mxu0 0.0
    %1851 = vmatpush1.msra.mxu0 0.0
    %1852 = vmatprep.subr.mxu0 0.0
    %1853 = vmatpush1.msra.mxu0 0.0
    %1854 = vmatprep.subr.mxu0 0.0
    %1855 = vmatpush1.msra.mxu0 0.0
    %1856 = vmatprep.subr.mxu0 0.0
    %1857 = vmatpush1.msra.mxu0 0.0
    %1858 = vmatprep.mubr.f32.mxu0 0.0
    %1859 = vmatmul.mubr.f32.gmra.mrb[0].mxu0 %v1789
    %v1860 = vpop.f32.mrb[0].mxu0
    %v1861 = vadd.f32 %v1786, %v1860
    %v1862 = vpop.f32.mrb[0].mxu0
    %1863 = vmatprep.mubr.f32.mxu0 0.0
    %1864 = vmatmul.mubr.f32.gmra.mrb[0].mxu0 %v1792
    %v1865 = vpop.f32.mrb[0].mxu0
    %v1866 = vadd.f32 %v1786, %v1865
    %v1867 = vpop.f32.mrb[0].mxu0
    %1868 = vdwg.mxu0
    %v1869 = vadd.f32 %v1694, %v1861
    %v1870 = vadd.f32 %v1695, %v1866
    %v1871 = vsel %vm139, %v1869, 0.0
    %1872 = vadd.xlane.f32.xlu0 %v1871
    %v1873 = vpop.xlane.xlu0 %1872
    %v1874 = vsel %vm139, %v1870, 0.0
    %1875 = vadd.xlane.f32.xlu0 %v1874
    %v1876 = vpop.xlane.xlu0 %1875
    %v1877 = vmul.f32 %v1873, %v1663
    %v1878 = vmul.f32 %v1876, %v1663
    %v1879 = vsub.f32 %v1869, %v1877
    %v1880 = vsub.f32 %v1870, %v1878
    %v1881 = vmul.f32 %v1879, %v1879
    %v1882 = vmul.f32 %v1880, %v1880
    %v1883 = vsel %vm139, %v1881, 0.0
    %1884 = vadd.xlane.f32.xlu0 %v1883
    %v1885 = vpop.xlane.xlu0 %1884
    %v1886 = vsel %vm139, %v1882, 0.0
    %1887 = vadd.xlane.f32.xlu0 %v1886
    %v1888 = vpop.xlane.xlu0 %1887
    %v1889 = vmul.f32 %v1885, %v1663
    %v1890 = vmul.f32 %v1888, %v1663
    %v1891 = vadd.f32 %v1889, 1e-05
    %v1892 = vadd.f32 %v1890, 1e-05
    %v1893 = vrsqrt.pop %v1891
    %v1894 = vrsqrt.pop %v1892
    %v1895 = vlaneseq
    %v1896 = vshrl.u32 %v1895, 7
    %v1897 = vsub.s32 0, %v1896
    %v1898 = vrot.slane %v133, %v1897
    %v1899 = vmul.f32 %v1893, %v1898
    %v1900 = vmul.f32 %v1894, %v1898
    %v1901 = vmul.f32 %v1879, %v1899
    %v1902 = vmul.f32 %v1880, %v1900
    %v1903 = vlaneseq
    %v1904 = vshrl.u32 %v1903, 7
    %v1905 = vsub.s32 0, %v1904
    %v1906 = vrot.slane %v134, %v1905
    %v1907 = vadd.f32 %v1901, %v1906
    %v1908 = vadd.f32 %v1902, %v1906
    %v1910 = vcombine.high %v1907, %v1907
    %v1912 = vunpack.c.l.s4 1966171168
    %v1913 = vunpack.c.0.s8 %v1912
    %v1914 = vlaneseq
    %v1915 = vshrl.u32 %v1914, 7
    %v1916 = vsub.s32 %v1913, %v1915
    %v1917 = vrot.slane %v1907, %v1916
    %v1919 = vunpack.c.l.s4 1966171168
    %v1920 = vunpack.c.0.s8 %v1919
    %v1921 = vlaneseq
    %v1922 = vshrl.u32 %v1921, 7
    %v1923 = vsub.s32 %v1920, %v1922
    %v1924 = vrot.slane %v1910, %v1923
    %v1925 = vcombine.high %v1917, %v1917
    %v1926 = vcombine.high %v1924, %v1924
    %v1928 = vunpack.c.l.s4 1966171168
    %v1929 = vunpack.c.0.s8 %v1928
    %v1930 = vlaneseq
    %v1931 = vshrl.u32 %v1930, 7
    %v1932 = vsub.s32 %v1929, %v1931
    %v1933 = vrot.slane %v1917, %v1932
    %v1935 = vunpack.c.l.s4 1966171168
    %v1936 = vunpack.c.0.s8 %v1935
    %v1937 = vlaneseq
    %v1938 = vshrl.u32 %v1937, 7
    %v1939 = vsub.s32 %v1936, %v1938
    %v1940 = vrot.slane %v1924, %v1939
    %v1942 = vunpack.c.l.s4 1966171168
    %v1943 = vunpack.c.0.s8 %v1942
    %v1944 = vlaneseq
    %v1945 = vshrl.u32 %v1944, 7
    %v1946 = vsub.s32 %v1943, %v1945
    %v1947 = vrot.slane %v1925, %v1946
    %v1949 = vunpack.c.l.s4 1966171168
    %v1950 = vunpack.c.0.s8 %v1949
    %v1951 = vlaneseq
    %v1952 = vshrl.u32 %v1951, 7
    %v1953 = vsub.s32 %v1950, %v1952
    %v1954 = vrot.slane %v1926, %v1953
    %v1955 = vcombine.high %v1933, %v1933
    %v1956 = vcombine.high %v1940, %v1940
    %v1957 = vcombine.high %v1947, %v1947
    %v1958 = vcombine.high %v1954, %v1954
    %v1968 = vcombine.high %v1908, %v1908
    %v1970 = vunpack.c.l.s4 1966171168
    %v1971 = vunpack.c.0.s8 %v1970
    %v1972 = vlaneseq
    %v1973 = vshrl.u32 %v1972, 7
    %v1974 = vsub.s32 %v1971, %v1973
    %v1975 = vrot.slane %v1908, %v1974
    %v1977 = vunpack.c.l.s4 1966171168
    %v1978 = vunpack.c.0.s8 %v1977
    %v1979 = vlaneseq
    %v1980 = vshrl.u32 %v1979, 7
    %v1981 = vsub.s32 %v1978, %v1980
    %v1982 = vrot.slane %v1968, %v1981
    %v1983 = vcombine.high %v1975, %v1975
    %v1984 = vcombine.high %v1982, %v1982
    %v1986 = vunpack.c.l.s4 1966171168
    %v1987 = vunpack.c.0.s8 %v1986
    %v1988 = vlaneseq
    %v1989 = vshrl.u32 %v1988, 7
    %v1990 = vsub.s32 %v1987, %v1989
    %v1991 = vrot.slane %v1975, %v1990
    %v1993 = vunpack.c.l.s4 1966171168
    %v1994 = vunpack.c.0.s8 %v1993
    %v1995 = vlaneseq
    %v1996 = vshrl.u32 %v1995, 7
    %v1997 = vsub.s32 %v1994, %v1996
    %v1998 = vrot.slane %v1982, %v1997
    %v2000 = vunpack.c.l.s4 1966171168
    %v2001 = vunpack.c.0.s8 %v2000
    %v2002 = vlaneseq
    %v2003 = vshrl.u32 %v2002, 7
    %v2004 = vsub.s32 %v2001, %v2003
    %v2005 = vrot.slane %v1983, %v2004
    %v2007 = vunpack.c.l.s4 1966171168
    %v2008 = vunpack.c.0.s8 %v2007
    %v2009 = vlaneseq
    %v2010 = vshrl.u32 %v2009, 7
    %v2011 = vsub.s32 %v2008, %v2010
    %v2012 = vrot.slane %v1984, %v2011
    %v2013 = vcombine.high %v1991, %v1991
    %v2014 = vcombine.high %v1998, %v1998
    %v2015 = vcombine.high %v2005, %v2005
    %v2016 = vcombine.high %v2012, %v2012
    %v2017 = vlaneseq
    %v2018 = vshrl.u32 %v2017, 7
    %v2019 = vsub.s32 0, %v2018
    %v2020 = vrot.slane %v1991, %v2019
    %v2021 = vlaneseq
    %v2022 = vshrl.u32 %v2021, 7
    %v2023 = vsub.s32 0, %v2022
    %v2024 = vrot.slane %v2005, %v2023
    %v2025 = vlaneseq
    %v2026 = vshrl.u32 %v2025, 7
    %v2027 = vsub.s32 0, %v2026
    %v2028 = vrot.slane %v2013, %v2027
    %v2029 = vlaneseq
    %v2030 = vshrl.u32 %v2029, 7
    %v2031 = vsub.s32 0, %v2030
    %v2032 = vrot.slane %v2015, %v2031
    %v2033 = vlaneseq
    %v2034 = vshrl.u32 %v2033, 7
    %v2035 = vsub.s32 0, %v2034
    %v2036 = vrot.slane %v1998, %v2035
    %v2037 = vlaneseq
    %v2038 = vshrl.u32 %v2037, 7
    %v2039 = vsub.s32 0, %v2038
    %v2040 = vrot.slane %v2012, %v2039
    %v2041 = vlaneseq
    %v2042 = vshrl.u32 %v2041, 7
    %v2043 = vsub.s32 0, %v2042
    %v2044 = vrot.slane %v2014, %v2043
    %v2045 = vlaneseq
    %v2046 = vshrl.u32 %v2045, 7
    %v2047 = vsub.s32 0, %v2046
    %v2048 = vrot.slane %v2016, %v2047
    %vm2057 = vcmask 1040384
    %v2058 = vsel %vm2057, %v1933, %v2020
    %v2059 = vsel %vm2057, %v1947, %v2024
    %v2060 = vsel %vm2057, %v1955, %v2028
    %v2061 = vsel %vm2057, %v1957, %v2032
    %v2062 = vsel %vm2057, %v1940, %v2036
    %v2063 = vsel %vm2057, %v1954, %v2040
    %v2064 = vsel %vm2057, %v1956, %v2044
    %v2065 = vsel %vm2057, %v1958, %v2048
    %vm2066 = vcmask 254976
    %2067 = vst.msk [vmem:[#allocation8] sm:$0x3] %vm2066, %v2058
    %2068 = vst.msk [vmem:[#allocation8 + $0x2] sm:$0x3] %vm2066, %v2059
    %2069 = vst.msk [vmem:[#allocation8 + $0x4] sm:$0x3] %vm2066, %v2060
    %2070 = vst.msk [vmem:[#allocation8 + $0x6] sm:$0x3] %vm2066, %v2061
    %2071 = vst.msk [vmem:[#allocation8 + $0x8] sm:$0x3] %vm2066, %v2062
    %2072 = vst.msk [vmem:[#allocation8 + $0xa] sm:$0x3] %vm2066, %v2063
    %2073 = vst.msk [vmem:[#allocation8 + $0xc] sm:$0x3] %vm2066, %v2064
    %2074 = vst.msk [vmem:[#allocation8 + $0xe] sm:$0x3] %vm2066, %v2065
    // Predicated region
    $region26: #{transformer_block.1} parent=1 // pred_check
      _
    $region27: #{transformer_block.1} parent=1 // pred_check_branch
      %2076 = sbr.rel (0) target = $region29
    $region28: #{transformer_block.1} parent=1 // pred_region
      %s2078 = ssub.s32 256, 256
      %2079 = vsyncadd [#allocation4], %s2078
      %s2080 = sshll.u32 [#allocation8], 4
      %s2081 = int_to_ptr.vmem [resolvable:$true] %s2080
      %2086 = dma.vmem_to_hbm [thread:$0]  %s2081, 256, %s3, [#allocation4], 32, 32, 2
    $region29: #{transformer_block.1} parent=1 // pred_fallthru
      _
    // Predicated region
    $region30: #{transformer_block.1} parent=1 // pred_check
      _
    $region31: #{transformer_block.1} parent=1 // pred_check_branch
      %2088 = sbr.rel (0) target = $region33
    $region32: #{transformer_block.1} parent=1 // pred_region
      %2089 = dma.done [#allocation4], 256
    $region33: #{transformer_block.1} parent=1 // pred_fallthru
      _
    %2090 = vsyncpa [#allocation3], 1
    %2091 = vsyncpa [#allocation6], 1
    %2092 = vsyncpa [#allocation4], 1

</llo_original>
